<compile_context>
chip_gen: v7x
topology: tpu7x:2x2x1
jax: 0.10.0
libtpu: 0.0.40
codegen_flags: <defaults>
</compile_context>

<pallas_src>
import numpy as np
import jax
import jax.numpy as jnp
from jax.experimental import pallas as pl
from jax.experimental.pallas import tpu as pltpu

# ----------------------------- constants -------------------------------------
N_QUBITS = 4
N_LAYERS = 2
EMBED_DIM = 128
QUANTUM_HIDDEN = 64
FINAL_HIDDEN = 128
DRUG_VOCAB = 65          # len(CHARISOSMISET)
PROT_VOCAB = 25          # len(CHARPROTSET)
BN_EPS = 1e-5
NORM_EPS = 1e-12
MAX_TILE_B = 1024        # v5e-safe; review: 1024 already ~85%+ of HBM roofline

# ------------------- host-side quantum circuit -> unitary --------------------
_I2 = np.eye(2, dtype=complex)
_H = np.array([[1, 1], [1, -1]], dtype=complex) / np.sqrt(2)
_X = np.array([[0, 1], [1, 0]], dtype=complex)
_Z = np.array([[1, 0], [0, -1]], dtype=complex)
_S = np.array([[1, 0], [0, 1j]], dtype=complex)
_P0 = np.array([[1, 0], [0, 0]], dtype=complex)
_P1 = np.array([[0, 0], [0, 1]], dtype=complex)


def _rx(t):
    c, s = np.cos(t / 2), np.sin(t / 2)
    return np.array([[c, -1j * s], [-1j * s, c]], dtype=complex)


def _ry(t):
    c, s = np.cos(t / 2), np.sin(t / 2)
    return np.array([[c, -s], [s, c]], dtype=complex)


def _rz(t):
    return np.array([[np.exp(-1j * t / 2), 0], [0, np.exp(1j * t / 2)]], dtype=complex)


def _embed1(gate, wire, n=N_QUBITS):
    # PennyLane: wire 0 is the most significant qubit.
    ops = [_I2] * n
    ops[wire] = gate
    U = ops[0]
    for g in ops[1:]:
        U = np.kron(U, g)
    return U


def _embed_ctrl(target_gate, control, target, n=N_QUBITS):
    return _embed1(_P0, control, n) + _embed1(_P1, control, n) @ _embed1(target_gate, target, n)


def circuit_unitary(params):
    """params: (N_LAYERS, 3*N_QUBITS) angles -> 16x16 complex unitary."""
    n = N_QUBITS
    U = np.eye(2 ** n, dtype=complex)
    for layer in range(N_LAYERS):
        for i in range(n):
            U = _embed1(_H, i) @ U
        for i in range(n):
            U = _embed1(_ry(params[layer, i]), i) @ U
            U = _embed1(_rz(params[layer, i + n]), i) @ U
            U = _embed1(_rx(params[layer, i + 2 * n]), i) @ U
        for i in range(n):
            U = _embed1(_S, i) @ U
        for i in range(n - 1):
            U = _embed_ctrl(_X, i, i + 1) @ U
            U = _embed_ctrl(_Z, i, i + 1) @ U
        U = _embed_ctrl(_X, n - 1, 0) @ U
        U = _embed_ctrl(_Z, n - 1, 0) @ U
    return U


def pauliz_signs():
    """(16, 4) table: signs[k, i] = eigenvalue of PauliZ(wire i) on basis state k."""
    n = N_QUBITS
    signs = np.zeros((2 ** n, n), dtype=np.float32)
    for k in range(2 ** n):
        for i in range(n):
            bit = (k >> (n - 1 - i)) & 1
            signs[k, i] = 1.0 - 2.0 * bit
    return signs


# ----------------------------- Pallas kernel ---------------------------------
def _model_kernel(x_ref, w1_ref, wqd_ref, wqp_ref, u_ref, mzqd_ref, mzqp_ref,
                  fw1_ref, fw2_ref, fw3_ref, bias_ref, out_ref):
    f32 = jnp.float32
    bf16 = jnp.bfloat16

    # packed bias tile (8, 128) f32; all slices start at lane 0
    b1 = bias_ref[0:1, :]              # (1,128) pre_fc biases (BN folded), drug|prot
    fb1 = bias_ref[1:2, :]             # (1,128) final fc1 bias (BN folded)
    bq_d = bias_ref[2:3, 0:16]         # (1,16)  drug_fc bias
    bq_p = bias_ref[3:4, 0:16]         # (1,16)  protein_fc bias
    qfb_d = bias_ref[4:5, 0:64]        # (1,64)  drug quantum-extractor fc bias (BN folded)
    qfb_p = bias_ref[5:6, 0:64]        # (1,64)  protein quantum-extractor fc bias
    fb2 = bias_ref[6:7, 0:64]          # (1,64)  final fc2 bias (BN folded)
    fb3 = bias_ref[7:8, 0:1]           # (1,1)   final fc3 bias

    # pre_fc (Linear+BN+ReLU), both branches fused block-diagonally: (TB,256)@(256,128)
    h = jnp.maximum(
        jnp.dot(x_ref[...], w1_ref[...], preferred_element_type=f32) + b1, 0.0)

    # drug_fc / protein_fc -> raw amplitudes (quantum path stays f32 for parity)
    qd = jnp.dot(h, wqd_ref[...], preferred_element_type=f32) + bq_d       # (TB,16)
    qp = jnp.dot(h, wqp_ref[...], preferred_element_type=f32) + bq_p       # (TB,16)

    # AmplitudeEmbedding(normalize=True): per-row L2 normalization of each branch
    inv_d = jax.lax.rsqrt(jnp.sum(qd * qd, axis=-1, keepdims=True) + NORM_EPS)
    inv_p = jax.lax.rsqrt(jnp.sum(qp * qp, axis=-1, keepdims=True) + NORM_EPS)

    # three SHARED circuits: amplitudes @ [Re1|Re2|Re3|Im1|Im2|Im3] -> (TB,96)
    y_d = jnp.dot(qd * inv_d, u_ref[...], preferred_element_type=f32)
    y_p = jnp.dot(qp * inv_p, u_ref[...], preferred_element_type=f32)

    # |amp|^2 -> probs -> PauliZ expvals -> extractor fc (+BN), all folded into mzq
    feat_d = jnp.maximum(
        jnp.dot(y_d * y_d, mzqd_ref[...], preferred_element_type=f32) + qfb_d, 0.0)
    feat_p = jnp.maximum(
        jnp.dot(y_p * y_p, mzqp_ref[...], preferred_element_type=f32) + qfb_p, 0.0)

    # final MLP (BN folded); torch.cat([drug, protein]) becomes a split matmul
    h1 = jnp.maximum(
        jnp.dot(feat_d.astype(bf16), fw1_ref[0:64, :], preferred_element_type=f32)
        + jnp.dot(feat_p.astype(bf16), fw1_ref[64:128, :], preferred_element_type=f32)
        + fb1, 0.0)                                                        # (TB,128)
    h2 = jnp.maximum(
        jnp.dot(h1.astype(bf16), fw2_ref[...], preferred_element_type=f32) + fb2,
        0.0)                                                               # (TB,64)

    # Linear(64 -> 1) as (8,64)@(64,TB): result is lane-dense, row 0 is the answer
    o8 = jnp.dot(fw3_ref[...], h2.T, preferred_element_type=f32)           # (8,TB)
    o = jnp.tanh(o8[0:1, :] + fb3)                                         # (1,TB)
    out_ref[...] = (o + 1.0) * 0.5 * (16.0 - 1.0) + 1.0


# ----------------------------- parameters ------------------------------------
def init_params():
    rng = np.random.default_rng(0)

    def linear(in_dim, out_dim):
        bound = 1.0 / np.sqrt(in_dim)
        w = rng.uniform(-bound, bound, size=(in_dim, out_dim)).astype(np.float32)
        b = rng.uniform(-bound, bound, size=(out_dim,)).astype(np.float32)
        return w, b

    # eval-mode BN (gamma=1, beta=0, running_mean=0, running_var=1) folded into Linear.
    # NOTE: re-fold if trained running stats are ever loaded.
    bn_scale = np.float32(1.0 / np.sqrt(1.0 + BN_EPS))

    def linear_bn(in_dim, out_dim):
        w, b = linear(in_dim, out_dim)
        return w * bn_scale, b * bn_scale

    def embedding(num_embeddings, dim):
        e = rng.standard_normal((num_embeddings, dim)).astype(np.float32)
        e[0] = 0.0  # padding_idx=0
        return jnp.asarray(e)

    p = {}
    p["drug_embedding"] = embedding(DRUG_VOCAB + 1, EMBED_DIM)       # (66, 128)
    p["protein_embedding"] = embedding(PROT_VOCAB + 1, EMBED_DIM)    # (26, 128)

    # ---- pre_fc (Linear+BN) fused block-diagonally over [drug | protein] ----
    dw1, db1 = linear_bn(EMBED_DIM, EMBED_DIM // 2)
    pw1, pb1 = linear_bn(EMBED_DIM, EMBED_DIM // 2)
    w1 = np.zeros((2 * EMBED_DIM, EMBED_DIM), np.float32)            # (256, 128)
    w1[:EMBED_DIM, :64] = dw1
    w1[EMBED_DIM:, 64:] = pw1
    b1 = np.concatenate([db1, pb1])                                  # (128,)

    # ---- drug_fc / protein_fc: inputs are the fused h (drug rows | protein rows) ----
    dwq, dbq = linear(EMBED_DIM // 2, 2 ** N_QUBITS)
    pwq, pbq = linear(EMBED_DIM // 2, 2 ** N_QUBITS)
    wq_d = np.zeros((EMBED_DIM, 16), np.float32)
    wq_d[:64, :] = dwq
    wq_p = np.zeros((EMBED_DIM, 16), np.float32)
    wq_p[64:, :] = pwq

    # ---- three SHARED quantum circuits -> (16, 96) [Re1|Re2|Re3|Im1|Im2|Im3] ----
    re_list, im_list = [], []
    for _ in range(3):
        q_params = rng.uniform(0.0, 2.0 * np.pi, size=(N_LAYERS, 3 * N_QUBITS))
        U = circuit_unitary(q_params)
        re_list.append(np.real(U).T.astype(np.float32))
        im_list.append(np.imag(U).T.astype(np.float32))
    u_cat = np.concatenate(re_list + im_list, axis=1)                # (16, 96)

    # ---- PauliZ sign table folded into quantum-extractor fc (+BN) weights ----
    zs = pauliz_signs()                                              # (16, 4)
    zblock = np.zeros((48, 12), np.float32)
    for k in range(3):
        zblock[16 * k:16 * (k + 1), 4 * k:4 * (k + 1)] = zs
    zz = np.vstack([zblock, zblock])                                 # (96, 12): Re^2 + Im^2
    qdw, qdb = linear_bn(3 * N_QUBITS, QUANTUM_HIDDEN)
    qpw, qpb = linear_bn(3 * N_QUBITS, QUANTUM_HIDDEN)
    mzq_d = (zz @ qdw).astype(np.float32)                            # (96, 64)
    mzq_p = (zz @ qpw).astype(np.float32)                            # (96, 64)

    # ---- final MLP (BN folded) ----
    fw1, fb1 = linear_bn(2 * QUANTUM_HIDDEN, FINAL_HIDDEN)           # (128, 128)
    fw2, fb2 = linear_bn(FINAL_HIDDEN, FINAL_HIDDEN // 2)            # (128, 64)
    fw3, fb3 = linear(FINAL_HIDDEN // 2, 1)                          # (64, 1), (1,)

    fw3s = np.zeros((8, 64), np.float32)                             # (8,64), row 0 = fw3
    fw3s[0, :] = fw3[:, 0]

    # ---- pack all biases into one (8, 128) f32 tile (all slices start at lane 0) ----
    bias = np.zeros((8, 128), np.float32)
    bias[0, :] = b1
    bias[1, :] = fb1
    bias[2, :16] = dbq
    bias[3, :16] = pbq
    bias[4, :64] = qdb
    bias[5, :64] = qpb
    bias[6, :64] = fb2
    bias[7, 0] = fb3[0]

    bf = lambda a: jnp.asarray(a, dtype=jnp.bfloat16)
    f32 = lambda a: jnp.asarray(a, dtype=jnp.float32)
    p["w1"] = bf(w1)           # heavy-FLOP matmuls in bf16
    p["fw1"] = bf(fw1)
    p["fw2"] = bf(fw2)
    p["wq_d"] = f32(wq_d)      # quantum path stays f32 (review item 7)
    p["wq_p"] = f32(wq_p)
    p["u"] = f32(u_cat)
    p["mzq_d"] = f32(mzq_d)
    p["mzq_p"] = f32(mzq_p)
    p["fw3s"] = f32(fw3s)
    p["bias"] = f32(bias)
    return p


# ------------------------------ wrapper --------------------------------------
def _round_up(x, m):
    return (x + m - 1) // m * m


def _run_pallas(x, p, tile_b, b_pad, use_buffered):
    def const_spec(arr):
        if use_buffered:
            # constant index_map -> single buffer is enough (saves VMEM)
            return pl.BlockSpec(arr.shape, lambda i: (0, 0),
                                pipeline_mode=pl.Buffered(1))
        return pl.BlockSpec(arr.shape, lambda i: (0, 0))

    weights = (p["w1"], p["wq_d"], p["wq_p"], p["u"], p["mzq_d"], p["mzq_p"],
               p["fw1"], p["fw2"], p["fw3s"], p["bias"])

    return pl.pallas_call(
        _model_kernel,
        out_shape=jax.ShapeDtypeStruct((1, b_pad), jnp.float32),
        grid_spec=pltpu.PrefetchScalarGridSpec(
            num_scalar_prefetch=0,
            grid=(b_pad // tile_b,),
            in_specs=[pl.BlockSpec((tile_b, 256), lambda i: (i, 0))]     # activations (bf16)
                     + [const_spec(w) for w in weights],
            out_specs=pl.BlockSpec((1, tile_b), lambda i: (0, i)),       # lane-dense output
        ),
        compiler_params=pltpu.CompilerParams(
            dimension_semantics=("parallel",),
            vmem_limit_bytes=32 * 1024 * 1024),
    )(x, *weights)


def quantum_drug_protein_forward(drug_tokens, protein_tokens, p):
    B, Ld = drug_tokens.shape
    Lp = protein_tokens.shape[1]

    # Sequence-mean embedding as a token-count matmul (exactly equals gather+mean,
    # avoids materializing (B, L, 128) twice).
    d_counts = jax.nn.one_hot(drug_tokens, DRUG_VOCAB + 1, dtype=jnp.float32).sum(axis=1)
    p_counts = jax.nn.one_hot(protein_tokens, PROT_VOCAB + 1, dtype=jnp.float32).sum(axis=1)
    demb = (d_counts * (1.0 / Ld)) @ p["drug_embedding"]      # (B, 128)
    pemb = (p_counts * (1.0 / Lp)) @ p["protein_embedding"]   # (B, 128)

    # Batch tiling: big tiles (amortize per-step overhead), multiple of 128 when the
    # grid has several steps (keeps lane-dense output blocks legal), grid >= 2 for
    # large B so both v7x TensorCores get work.
    if B <= MAX_TILE_B:
        tile_b = _round_up(B, 16)      # single grid step; bf16 sublane-packing friendly
    else:
        tile_b = MAX_TILE_B
    b_pad = _round_up(B, tile_b)

    # Activations straight into a pre-padded bf16 buffer (halves the HBM read).
    x = jnp.zeros((b_pad, 256), jnp.bfloat16)
    x = jax.lax.dynamic_update_slice(x, demb.astype(jnp.bfloat16), (0, 0))
    x = jax.lax.dynamic_update_slice(x, pemb.astype(jnp.bfloat16), (0, 128))

    try:
        out = _run_pallas(x, p, tile_b, b_pad, use_buffered=True)
    except Exception:
        # pipeline_mode / pl.Buffered(1) not supported by this JAX build -> default
        # double-buffered weight blocks (correctness identical, ~200 KiB more VMEM).
        out = _run_pallas(x, p, tile_b, b_pad, use_buffered=False)

    return out[0, :B][:, None]


# -------------------------------- main ---------------------------------------
if __name__ == "__main__":
    B, L = 2, 8
    key = jax.random.PRNGKey(0)
    kd, kp = jax.random.split(key)
    drug_tokens = jax.random.randint(kd, (B, L), 1, DRUG_VOCAB + 1, dtype=jnp.int32)
    protein_tokens = jax.random.randint(kp, (B, L), 1, PROT_VOCAB + 1, dtype=jnp.int32)

    params = init_params()
    out = quantum_drug_protein_forward(drug_tokens, protein_tokens, params)
    out = jax.block_until_ready(out)
    assert out.shape == (B, 1)
    assert bool(jnp.all(jnp.isfinite(out)))
    assert bool(jnp.all((out >= 1.0 - 1e-3) & (out <= 16.0 + 1e-3)))
    print("KERNEL_OK")
</pallas_src>

<mosaic_0001>
module attributes {stable_mosaic.version = 11 : i64} {
  func.func @_model_kernel(%arg0: i32, %arg1: memref<16x256xbf16, #tpu.memory_space<vmem>>, %arg2: memref<256x128xbf16, #tpu.memory_space<vmem>>, %arg3: memref<128x16xf32, #tpu.memory_space<vmem>>, %arg4: memref<128x16xf32, #tpu.memory_space<vmem>>, %arg5: memref<16x96xf32, #tpu.memory_space<vmem>>, %arg6: memref<96x64xf32, #tpu.memory_space<vmem>>, %arg7: memref<96x64xf32, #tpu.memory_space<vmem>>, %arg8: memref<128x128xbf16, #tpu.memory_space<vmem>>, %arg9: memref<128x64xbf16, #tpu.memory_space<vmem>>, %arg10: memref<8x64xf32, #tpu.memory_space<vmem>>, %arg11: memref<8x128xf32, #tpu.memory_space<vmem>>, %arg12: memref<1x16xf32, #tpu.memory_space<vmem>>) attributes {dimension_semantics = [#tpu.dimension_semantics<parallel>], iteration_bounds = array<i64: 1>, scalar_prefetch = 0 : i64, scratch_operands = 0 : i64, tpu.core_type = #tpu.core_type<tc>, window_params = [{transform_indices = @transform_0, window_bounds = array<i64: 16, 256>}, {pipeline_mode = #tpu.pipeline_mode<synchronous>, transform_indices = @transform_1, window_bounds = array<i64: 256, 128>}, {pipeline_mode = #tpu.pipeline_mode<synchronous>, transform_indices = @transform_2, window_bounds = array<i64: 128, 16>}, {pipeline_mode = #tpu.pipeline_mode<synchronous>, transform_indices = @transform_3, window_bounds = array<i64: 128, 16>}, {pipeline_mode = #tpu.pipeline_mode<synchronous>, transform_indices = @transform_4, window_bounds = array<i64: 16, 96>}, {pipeline_mode = #tpu.pipeline_mode<synchronous>, transform_indices = @transform_5, window_bounds = array<i64: 96, 64>}, {pipeline_mode = #tpu.pipeline_mode<synchronous>, transform_indices = @transform_6, window_bounds = array<i64: 96, 64>}, {pipeline_mode = #tpu.pipeline_mode<synchronous>, transform_indices = @transform_7, window_bounds = array<i64: 128, 128>}, {pipeline_mode = #tpu.pipeline_mode<synchronous>, transform_indices = @transform_8, window_bounds = array<i64: 128, 64>}, {pipeline_mode = #tpu.pipeline_mode<synchronous>, transform_indices = @transform_9, window_bounds = array<i64: 8, 64>}, {pipeline_mode = #tpu.pipeline_mode<synchronous>, transform_indices = @transform_10, window_bounds = array<i64: 8, 128>}, {transform_indices = @transform_11, window_bounds = array<i64: 1, 16>}]} {
    %c0 = arith.constant 0 : index
    %c0_0 = arith.constant 0 : index
    %0 = vector.load %arg11[%c0, %c0_0] : memref<8x128xf32, #tpu.memory_space<vmem>>, vector<1x128xf32>
    %c1 = arith.constant 1 : index
    %c0_1 = arith.constant 0 : index
    %1 = vector.load %arg11[%c1, %c0_1] : memref<8x128xf32, #tpu.memory_space<vmem>>, vector<1x128xf32>
    %c2 = arith.constant 2 : index
    %c0_2 = arith.constant 0 : index
    %2 = vector.load %arg11[%c2, %c0_2] : memref<8x128xf32, #tpu.memory_space<vmem>>, vector<1x16xf32>
    %c3 = arith.constant 3 : index
    %c0_3 = arith.constant 0 : index
    %3 = vector.load %arg11[%c3, %c0_3] : memref<8x128xf32, #tpu.memory_space<vmem>>, vector<1x16xf32>
    %c4 = arith.constant 4 : index
    %c0_4 = arith.constant 0 : index
    %4 = vector.load %arg11[%c4, %c0_4] : memref<8x128xf32, #tpu.memory_space<vmem>>, vector<1x64xf32>
    %c5 = arith.constant 5 : index
    %c0_5 = arith.constant 0 : index
    %5 = vector.load %arg11[%c5, %c0_5] : memref<8x128xf32, #tpu.memory_space<vmem>>, vector<1x64xf32>
    %c6 = arith.constant 6 : index
    %c0_6 = arith.constant 0 : index
    %6 = vector.load %arg11[%c6, %c0_6] : memref<8x128xf32, #tpu.memory_space<vmem>>, vector<1x64xf32>
    %c7 = arith.constant 7 : index
    %c0_7 = arith.constant 0 : index
    %7 = vector.load %arg11[%c7, %c0_7] : memref<8x128xf32, #tpu.memory_space<vmem>>, vector<1x1xf32>
    %c0_8 = arith.constant 0 : index
    %c0_9 = arith.constant 0 : index
    %8 = vector.load %arg1[%c0_8, %c0_9] : memref<16x256xbf16, #tpu.memory_space<vmem>>, vector<16x256xbf16>
    %c0_10 = arith.constant 0 : index
    %c0_11 = arith.constant 0 : index
    %9 = vector.load %arg2[%c0_10, %c0_11] : memref<256x128xbf16, #tpu.memory_space<vmem>>, vector<256x128xbf16>
    %cst = arith.constant dense<0.000000e+00> : vector<16x128xf32>
    %10 = tpu.matmul %8, %9, %cst {dimension_numbers = #tpu.dot_dimension_numbers<[1], [0], [0], [1], [0, 0, 1, 1], [], []>} : vector<16x256xbf16>, vector<256x128xbf16>, vector<16x128xf32> -> vector<16x128xf32>
    %11 = vector.broadcast %0 : vector<1x128xf32> to vector<16x128xf32>
    %12 = arith.addf %10, %11 : vector<16x128xf32>
    %cst_12 = arith.constant 0.000000e+00 : f32
    %13 = vector.broadcast %cst_12 : f32 to vector<16x128xf32>
    %14 = arith.maximumf %12, %13 : vector<16x128xf32>
    %c0_13 = arith.constant 0 : index
    %c0_14 = arith.constant 0 : index
    %15 = vector.load %arg3[%c0_13, %c0_14] : memref<128x16xf32, #tpu.memory_space<vmem>>, vector<128x16xf32>
    %cst_15 = arith.constant dense<0.000000e+00> : vector<16x16xf32>
    %16 = tpu.matmul %14, %15, %cst_15 {dimension_numbers = #tpu.dot_dimension_numbers<[1], [0], [0], [1], [0, 0, 1, 1], [], []>} : vector<16x128xf32>, vector<128x16xf32>, vector<16x16xf32> -> vector<16x16xf32>
    %17 = vector.broadcast %2 : vector<1x16xf32> to vector<16x16xf32>
    %18 = arith.addf %16, %17 : vector<16x16xf32>
    %c0_16 = arith.constant 0 : index
    %c0_17 = arith.constant 0 : index
    %19 = vector.load %arg4[%c0_16, %c0_17] : memref<128x16xf32, #tpu.memory_space<vmem>>, vector<128x16xf32>
    %cst_18 = arith.constant dense<0.000000e+00> : vector<16x16xf32>
    %20 = tpu.matmul %14, %19, %cst_18 {dimension_numbers = #tpu.dot_dimension_numbers<[1], [0], [0], [1], [0, 0, 1, 1], [], []>} : vector<16x128xf32>, vector<128x16xf32>, vector<16x16xf32> -> vector<16x16xf32>
    %21 = vector.broadcast %3 : vector<1x16xf32> to vector<16x16xf32>
    %22 = arith.addf %20, %21 : vector<16x16xf32>
    %23 = arith.mulf %18, %18 : vector<16x16xf32>
    %cst_19 = arith.constant dense<0.000000e+00> : vector<16xf32>
    %24 = vector.multi_reduction <add>, %23, %cst_19 [1] : vector<16x16xf32> to vector<16xf32>
    %25 = vector.shape_cast %24 : vector<16xf32> to vector<16x1xf32>
    %cst_20 = arith.constant 9.99999996E-13 : f32
    %26 = vector.broadcast %cst_20 : f32 to vector<16x1xf32>
    %27 = arith.addf %25, %26 : vector<16x1xf32>
    %28 = math.rsqrt %27 : vector<16x1xf32>
    %29 = arith.mulf %22, %22 : vector<16x16xf32>
    %cst_21 = arith.constant dense<0.000000e+00> : vector<16xf32>
    %30 = vector.multi_reduction <add>, %29, %cst_21 [1] : vector<16x16xf32> to vector<16xf32>
    %31 = vector.shape_cast %30 : vector<16xf32> to vector<16x1xf32>
    %cst_22 = arith.constant 9.99999996E-13 : f32
    %32 = vector.broadcast %cst_22 : f32 to vector<16x1xf32>
    %33 = arith.addf %31, %32 : vector<16x1xf32>
    %34 = math.rsqrt %33 : vector<16x1xf32>
    %35 = vector.broadcast %28 : vector<16x1xf32> to vector<16x16xf32>
    %36 = arith.mulf %18, %35 : vector<16x16xf32>
    %c0_23 = arith.constant 0 : index
    %c0_24 = arith.constant 0 : index
    %37 = vector.load %arg5[%c0_23, %c0_24] : memref<16x96xf32, #tpu.memory_space<vmem>>, vector<16x96xf32>
    %cst_25 = arith.constant dense<0.000000e+00> : vector<16x96xf32>
    %38 = tpu.matmul %36, %37, %cst_25 {dimension_numbers = #tpu.dot_dimension_numbers<[1], [0], [0], [1], [0, 0, 1, 1], [], []>} : vector<16x16xf32>, vector<16x96xf32>, vector<16x96xf32> -> vector<16x96xf32>
    %39 = vector.broadcast %34 : vector<16x1xf32> to vector<16x16xf32>
    %40 = arith.mulf %22, %39 : vector<16x16xf32>
    %c0_26 = arith.constant 0 : index
    %c0_27 = arith.constant 0 : index
    %41 = vector.load %arg5[%c0_26, %c0_27] : memref<16x96xf32, #tpu.memory_space<vmem>>, vector<16x96xf32>
    %cst_28 = arith.constant dense<0.000000e+00> : vector<16x96xf32>
    %42 = tpu.matmul %40, %41, %cst_28 {dimension_numbers = #tpu.dot_dimension_numbers<[1], [0], [0], [1], [0, 0, 1, 1], [], []>} : vector<16x16xf32>, vector<16x96xf32>, vector<16x96xf32> -> vector<16x96xf32>
    %43 = arith.mulf %38, %38 : vector<16x96xf32>
    %c0_29 = arith.constant 0 : index
    %c0_30 = arith.constant 0 : index
    %44 = vector.load %arg6[%c0_29, %c0_30] : memref<96x64xf32, #tpu.memory_space<vmem>>, vector<96x64xf32>
    %cst_31 = arith.constant dense<0.000000e+00> : vector<16x64xf32>
    %45 = tpu.matmul %43, %44, %cst_31 {dimension_numbers = #tpu.dot_dimension_numbers<[1], [0], [0], [1], [0, 0, 1, 1], [], []>} : vector<16x96xf32>, vector<96x64xf32>, vector<16x64xf32> -> vector<16x64xf32>
    %46 = vector.broadcast %4 : vector<1x64xf32> to vector<16x64xf32>
    %47 = arith.addf %45, %46 : vector<16x64xf32>
    %cst_32 = arith.constant 0.000000e+00 : f32
    %48 = vector.broadcast %cst_32 : f32 to vector<16x64xf32>
    %49 = arith.maximumf %47, %48 : vector<16x64xf32>
    %50 = arith.mulf %42, %42 : vector<16x96xf32>
    %c0_33 = arith.constant 0 : index
    %c0_34 = arith.constant 0 : index
    %51 = vector.load %arg7[%c0_33, %c0_34] : memref<96x64xf32, #tpu.memory_space<vmem>>, vector<96x64xf32>
    %cst_35 = arith.constant dense<0.000000e+00> : vector<16x64xf32>
    %52 = tpu.matmul %50, %51, %cst_35 {dimension_numbers = #tpu.dot_dimension_numbers<[1], [0], [0], [1], [0, 0, 1, 1], [], []>} : vector<16x96xf32>, vector<96x64xf32>, vector<16x64xf32> -> vector<16x64xf32>
    %53 = vector.broadcast %5 : vector<1x64xf32> to vector<16x64xf32>
    %54 = arith.addf %52, %53 : vector<16x64xf32>
    %cst_36 = arith.constant 0.000000e+00 : f32
    %55 = vector.broadcast %cst_36 : f32 to vector<16x64xf32>
    %56 = arith.maximumf %54, %55 : vector<16x64xf32>
    %57 = arith.truncf %49 : vector<16x64xf32> to vector<16x64xbf16>
    %c0_37 = arith.constant 0 : index
    %c0_38 = arith.constant 0 : index
    %58 = vector.load %arg8[%c0_37, %c0_38] : memref<128x128xbf16, #tpu.memory_space<vmem>>, vector<64x128xbf16>
    %cst_39 = arith.constant dense<0.000000e+00> : vector<16x128xf32>
    %59 = tpu.matmul %57, %58, %cst_39 {dimension_numbers = #tpu.dot_dimension_numbers<[1], [0], [0], [1], [0, 0, 1, 1], [], []>} : vector<16x64xbf16>, vector<64x128xbf16>, vector<16x128xf32> -> vector<16x128xf32>
    %60 = arith.truncf %56 : vector<16x64xf32> to vector<16x64xbf16>
    %c64 = arith.constant 64 : index
    %c0_40 = arith.constant 0 : index
    %61 = vector.load %arg8[%c64, %c0_40] : memref<128x128xbf16, #tpu.memory_space<vmem>>, vector<64x128xbf16>
    %cst_41 = arith.constant dense<0.000000e+00> : vector<16x128xf32>
    %62 = tpu.matmul %60, %61, %cst_41 {dimension_numbers = #tpu.dot_dimension_numbers<[1], [0], [0], [1], [0, 0, 1, 1], [], []>} : vector<16x64xbf16>, vector<64x128xbf16>, vector<16x128xf32> -> vector<16x128xf32>
    %63 = arith.addf %59, %62 : vector<16x128xf32>
    %64 = vector.broadcast %1 : vector<1x128xf32> to vector<16x128xf32>
    %65 = arith.addf %63, %64 : vector<16x128xf32>
    %cst_42 = arith.constant 0.000000e+00 : f32
    %66 = vector.broadcast %cst_42 : f32 to vector<16x128xf32>
    %67 = arith.maximumf %65, %66 : vector<16x128xf32>
    %68 = arith.truncf %67 : vector<16x128xf32> to vector<16x128xbf16>
    %c0_43 = arith.constant 0 : index
    %c0_44 = arith.constant 0 : index
    %69 = vector.load %arg9[%c0_43, %c0_44] : memref<128x64xbf16, #tpu.memory_space<vmem>>, vector<128x64xbf16>
    %cst_45 = arith.constant dense<0.000000e+00> : vector<16x64xf32>
    %70 = tpu.matmul %68, %69, %cst_45 {dimension_numbers = #tpu.dot_dimension_numbers<[1], [0], [0], [1], [0, 0, 1, 1], [], []>} : vector<16x128xbf16>, vector<128x64xbf16>, vector<16x64xf32> -> vector<16x64xf32>
    %71 = vector.broadcast %6 : vector<1x64xf32> to vector<16x64xf32>
    %72 = arith.addf %70, %71 : vector<16x64xf32>
    %cst_46 = arith.constant 0.000000e+00 : f32
    %73 = vector.broadcast %cst_46 : f32 to vector<16x64xf32>
    %74 = arith.maximumf %72, %73 : vector<16x64xf32>
    %c0_47 = arith.constant 0 : index
    %c0_48 = arith.constant 0 : index
    %75 = vector.load %arg10[%c0_47, %c0_48] : memref<8x64xf32, #tpu.memory_space<vmem>>, vector<8x64xf32>
    %76 = tpu.transpose %74, [1, 0] : vector<16x64xf32> -> vector<64x16xf32>
    %cst_49 = arith.constant dense<0.000000e+00> : vector<8x16xf32>
    %77 = tpu.matmul %75, %76, %cst_49 {dimension_numbers = #tpu.dot_dimension_numbers<[1], [0], [0], [1], [0, 0, 1, 1], [], []>} : vector<8x64xf32>, vector<64x16xf32>, vector<8x16xf32> -> vector<8x16xf32>
    %78 = vector.extract_strided_slice %77 {offsets = [0, 0], sizes = [1, 16], strides = [1, 1]} : vector<8x16xf32> to vector<1x16xf32>
    %79 = vector.broadcast %7 : vector<1x1xf32> to vector<1x16xf32>
    %80 = arith.addf %78, %79 : vector<1x16xf32>
    %81 = math.tanh %80 : vector<1x16xf32>
    %cst_50 = arith.constant 1.000000e+00 : f32
    %82 = vector.broadcast %cst_50 : f32 to vector<1x16xf32>
    %83 = arith.addf %81, %82 : vector<1x16xf32>
    %cst_51 = arith.constant 5.000000e-01 : f32
    %84 = vector.broadcast %cst_51 : f32 to vector<1x16xf32>
    %85 = arith.mulf %83, %84 : vector<1x16xf32>
    %cst_52 = arith.constant 1.500000e+01 : f32
    %86 = vector.broadcast %cst_52 : f32 to vector<1x16xf32>
    %87 = arith.mulf %85, %86 : vector<1x16xf32>
    %cst_53 = arith.constant 1.000000e+00 : f32
    %88 = vector.broadcast %cst_53 : f32 to vector<1x16xf32>
    %89 = arith.addf %87, %88 : vector<1x16xf32>
    %c0_54 = arith.constant 0 : index
    %c0_55 = arith.constant 0 : index
    %90 = vector.load %arg12[%c0_54, %c0_55] : memref<1x16xf32, #tpu.memory_space<vmem>>, vector<1x16xf32>
    tpu.vector_store %arg12[%c0_54, %c0_55], %89 {strides = array<i32>} : memref<1x16xf32, #tpu.memory_space<vmem>>, vector<1x16xf32>,
    return
  }
  func.func @transform_0(%arg0: i32) -> (i32, i32) {
    %c0_i32 = arith.constant 0 : i32
    %c0_i32_0 = arith.constant 0 : i32
    return %arg0, %c0_i32 : i32, i32
  }
  func.func @transform_1(%arg0: i32) -> (i32, i32) {
    %c0_i32 = arith.constant 0 : i32
    %c0_i32_0 = arith.constant 0 : i32
    %c0_i32_1 = arith.constant 0 : i32
    return %c0_i32, %c0_i32_0 : i32, i32
  }
  func.func @transform_2(%arg0: i32) -> (i32, i32) {
    %c0_i32 = arith.constant 0 : i32
    %c0_i32_0 = arith.constant 0 : i32
    %c0_i32_1 = arith.constant 0 : i32
    return %c0_i32, %c0_i32_0 : i32, i32
  }
  func.func @transform_3(%arg0: i32) -> (i32, i32) {
    %c0_i32 = arith.constant 0 : i32
    %c0_i32_0 = arith.constant 0 : i32
    %c0_i32_1 = arith.constant 0 : i32
    return %c0_i32, %c0_i32_0 : i32, i32
  }
  func.func @transform_4(%arg0: i32) -> (i32, i32) {
    %c0_i32 = arith.constant 0 : i32
    %c0_i32_0 = arith.constant 0 : i32
    %c0_i32_1 = arith.constant 0 : i32
    return %c0_i32, %c0_i32_0 : i32, i32
  }
  func.func @transform_5(%arg0: i32) -> (i32, i32) {
    %c0_i32 = arith.constant 0 : i32
    %c0_i32_0 = arith.constant 0 : i32
    %c0_i32_1 = arith.constant 0 : i32
    return %c0_i32, %c0_i32_0 : i32, i32
  }
  func.func @transform_6(%arg0: i32) -> (i32, i32) {
    %c0_i32 = arith.constant 0 : i32
    %c0_i32_0 = arith.constant 0 : i32
    %c0_i32_1 = arith.constant 0 : i32
    return %c0_i32, %c0_i32_0 : i32, i32
  }
  func.func @transform_7(%arg0: i32) -> (i32, i32) {
    %c0_i32 = arith.constant 0 : i32
    %c0_i32_0 = arith.constant 0 : i32
    %c0_i32_1 = arith.constant 0 : i32
    return %c0_i32, %c0_i32_0 : i32, i32
  }
  func.func @transform_8(%arg0: i32) -> (i32, i32) {
    %c0_i32 = arith.constant 0 : i32
    %c0_i32_0 = arith.constant 0 : i32
    %c0_i32_1 = arith.constant 0 : i32
    return %c0_i32, %c0_i32_0 : i32, i32
  }
  func.func @transform_9(%arg0: i32) -> (i32, i32) {
    %c0_i32 = arith.constant 0 : i32
    %c0_i32_0 = arith.constant 0 : i32
    %c0_i32_1 = arith.constant 0 : i32
    return %c0_i32, %c0_i32_0 : i32, i32
  }
  func.func @transform_10(%arg0: i32) -> (i32, i32) {
    %c0_i32 = arith.constant 0 : i32
    %c0_i32_0 = arith.constant 0 : i32
    %c0_i32_1 = arith.constant 0 : i32
    return %c0_i32, %c0_i32_0 : i32, i32
  }
  func.func @transform_11(%arg0: i32) -> (i32, i32) {
    %c0_i32 = arith.constant 0 : i32
    %c0_i32_0 = arith.constant 0 : i32
    return %c0_i32, %arg0 : i32, i32
  }
}

module attributes {stable_mosaic.version = 11 : i64} {
  func.func @_model_kernel(%arg0: i32, %arg1: memref<16x256xbf16, #tpu.memory_space<vmem>>, %arg2: memref<256x128xbf16, #tpu.memory_space<vmem>>, %arg3: memref<128x16xf32, #tpu.memory_space<vmem>>, %arg4: memref<128x16xf32, #tpu.memory_space<vmem>>, %arg5: memref<16x96xf32, #tpu.memory_space<vmem>>, %arg6: memref<96x64xf32, #tpu.memory_space<vmem>>, %arg7: memref<96x64xf32, #tpu.memory_space<vmem>>, %arg8: memref<128x128xbf16, #tpu.memory_space<vmem>>, %arg9: memref<128x64xbf16, #tpu.memory_space<vmem>>, %arg10: memref<8x64xf32, #tpu.memory_space<vmem>>, %arg11: memref<8x128xf32, #tpu.memory_space<vmem>>, %arg12: memref<1x16xf32, #tpu.memory_space<vmem>>) attributes {dimension_semantics = [#tpu.dimension_semantics<parallel>], iteration_bounds = array<i64: 1>, scalar_prefetch = 0 : i64, scratch_operands = 0 : i64, tpu.core_type = #tpu.core_type<tc>, window_params = [{transform_indices = @transform_0, window_bounds = array<i64: 16, 256>}, {pipeline_mode = #tpu.pipeline_mode<synchronous>, transform_indices = @transform_1, window_bounds = array<i64: 256, 128>}, {pipeline_mode = #tpu.pipeline_mode<synchronous>, transform_indices = @transform_2, window_bounds = array<i64: 128, 16>}, {pipeline_mode = #tpu.pipeline_mode<synchronous>, transform_indices = @transform_3, window_bounds = array<i64: 128, 16>}, {pipeline_mode = #tpu.pipeline_mode<synchronous>, transform_indices = @transform_4, window_bounds = array<i64: 16, 96>}, {pipeline_mode = #tpu.pipeline_mode<synchronous>, transform_indices = @transform_5, window_bounds = array<i64: 96, 64>}, {pipeline_mode = #tpu.pipeline_mode<synchronous>, transform_indices = @transform_6, window_bounds = array<i64: 96, 64>}, {pipeline_mode = #tpu.pipeline_mode<synchronous>, transform_indices = @transform_7, window_bounds = array<i64: 128, 128>}, {pipeline_mode = #tpu.pipeline_mode<synchronous>, transform_indices = @transform_8, window_bounds = array<i64: 128, 64>}, {pipeline_mode = #tpu.pipeline_mode<synchronous>, transform_indices = @transform_9, window_bounds = array<i64: 8, 64>}, {pipeline_mode = #tpu.pipeline_mode<synchronous>, transform_indices = @transform_10, window_bounds = array<i64: 8, 128>}, {transform_indices = @transform_11, window_bounds = array<i64: 1, 16>}]} {
    %c0 = arith.constant 0 : index
    %c0_0 = arith.constant 0 : index
    %0 = vector.load %arg11[%c0, %c0_0] : memref<8x128xf32, #tpu.memory_space<vmem>>, vector<1x128xf32>
    %c1 = arith.constant 1 : index
    %c0_1 = arith.constant 0 : index
    %1 = vector.load %arg11[%c1, %c0_1] : memref<8x128xf32, #tpu.memory_space<vmem>>, vector<1x128xf32>
    %c2 = arith.constant 2 : index
    %c0_2 = arith.constant 0 : index
    %2 = vector.load %arg11[%c2, %c0_2] : memref<8x128xf32, #tpu.memory_space<vmem>>, vector<1x16xf32>
    %c3 = arith.constant 3 : index
    %c0_3 = arith.constant 0 : index
    %3 = vector.load %arg11[%c3, %c0_3] : memref<8x128xf32, #tpu.memory_space<vmem>>, vector<1x16xf32>
    %c4 = arith.constant 4 : index
    %c0_4 = arith.constant 0 : index
    %4 = vector.load %arg11[%c4, %c0_4] : memref<8x128xf32, #tpu.memory_space<vmem>>, vector<1x64xf32>
    %c5 = arith.constant 5 : index
    %c0_5 = arith.constant 0 : index
    %5 = vector.load %arg11[%c5, %c0_5] : memref<8x128xf32, #tpu.memory_space<vmem>>, vector<1x64xf32>
    %c6 = arith.constant 6 : index
    %c0_6 = arith.constant 0 : index
    %6 = vector.load %arg11[%c6, %c0_6] : memref<8x128xf32, #tpu.memory_space<vmem>>, vector<1x64xf32>
    %c7 = arith.constant 7 : index
    %c0_7 = arith.constant 0 : index
    %7 = vector.load %arg11[%c7, %c0_7] : memref<8x128xf32, #tpu.memory_space<vmem>>, vector<1x1xf32>
    %c0_8 = arith.constant 0 : index
    %c0_9 = arith.constant 0 : index
    %8 = vector.load %arg1[%c0_8, %c0_9] : memref<16x256xbf16, #tpu.memory_space<vmem>>, vector<16x256xbf16>
    %c0_10 = arith.constant 0 : index
    %c0_11 = arith.constant 0 : index
    %9 = vector.load %arg2[%c0_10, %c0_11] : memref<256x128xbf16, #tpu.memory_space<vmem>>, vector<256x128xbf16>
    %cst = arith.constant dense<0.000000e+00> : vector<16x128xf32>
    %10 = tpu.matmul %8, %9, %cst {dimension_numbers = #tpu.dot_dimension_numbers<[1], [0], [0], [1], [0, 0, 1, 1], [], []>} : vector<16x256xbf16>, vector<256x128xbf16>, vector<16x128xf32> -> vector<16x128xf32>
    %11 = vector.broadcast %0 : vector<1x128xf32> to vector<16x128xf32>
    %12 = arith.addf %10, %11 : vector<16x128xf32>
    %cst_12 = arith.constant 0.000000e+00 : f32
    %13 = vector.broadcast %cst_12 : f32 to vector<16x128xf32>
    %14 = arith.maximumf %12, %13 : vector<16x128xf32>
    %c0_13 = arith.constant 0 : index
    %c0_14 = arith.constant 0 : index
    %15 = vector.load %arg3[%c0_13, %c0_14] : memref<128x16xf32, #tpu.memory_space<vmem>>, vector<128x16xf32>
    %cst_15 = arith.constant dense<0.000000e+00> : vector<16x16xf32>
    %16 = tpu.matmul %14, %15, %cst_15 {dimension_numbers = #tpu.dot_dimension_numbers<[1], [0], [0], [1], [0, 0, 1, 1], [], []>} : vector<16x128xf32>, vector<128x16xf32>, vector<16x16xf32> -> vector<16x16xf32>
    %17 = vector.broadcast %2 : vector<1x16xf32> to vector<16x16xf32>
    %18 = arith.addf %16, %17 : vector<16x16xf32>
    %c0_16 = arith.constant 0 : index
    %c0_17 = arith.constant 0 : index
    %19 = vector.load %arg4[%c0_16, %c0_17] : memref<128x16xf32, #tpu.memory_space<vmem>>, vector<128x16xf32>
    %cst_18 = arith.constant dense<0.000000e+00> : vector<16x16xf32>
    %20 = tpu.matmul %14, %19, %cst_18 {dimension_numbers = #tpu.dot_dimension_numbers<[1], [0], [0], [1], [0, 0, 1, 1], [], []>} : vector<16x128xf32>, vector<128x16xf32>, vector<16x16xf32> -> vector<16x16xf32>
    %21 = vector.broadcast %3 : vector<1x16xf32> to vector<16x16xf32>
    %22 = arith.addf %20, %21 : vector<16x16xf32>
    %23 = arith.mulf %18, %18 : vector<16x16xf32>
    %cst_19 = arith.constant dense<0.000000e+00> : vector<16xf32>
    %24 = vector.multi_reduction <add>, %23, %cst_19 [1] : vector<16x16xf32> to vector<16xf32>
    %25 = vector.shape_cast %24 : vector<16xf32> to vector<16x1xf32>
    %cst_20 = arith.constant 9.99999996E-13 : f32
    %26 = vector.broadcast %cst_20 : f32 to vector<16x1xf32>
    %27 = arith.addf %25, %26 : vector<16x1xf32>
    %28 = math.rsqrt %27 : vector<16x1xf32>
    %29 = arith.mulf %22, %22 : vector<16x16xf32>
    %cst_21 = arith.constant dense<0.000000e+00> : vector<16xf32>
    %30 = vector.multi_reduction <add>, %29, %cst_21 [1] : vector<16x16xf32> to vector<16xf32>
    %31 = vector.shape_cast %30 : vector<16xf32> to vector<16x1xf32>
    %cst_22 = arith.constant 9.99999996E-13 : f32
    %32 = vector.broadcast %cst_22 : f32 to vector<16x1xf32>
    %33 = arith.addf %31, %32 : vector<16x1xf32>
    %34 = math.rsqrt %33 : vector<16x1xf32>
    %35 = vector.broadcast %28 : vector<16x1xf32> to vector<16x16xf32>
    %36 = arith.mulf %18, %35 : vector<16x16xf32>
    %c0_23 = arith.constant 0 : index
    %c0_24 = arith.constant 0 : index
    %37 = vector.load %arg5[%c0_23, %c0_24] : memref<16x96xf32, #tpu.memory_space<vmem>>, vector<16x96xf32>
    %cst_25 = arith.constant dense<0.000000e+00> : vector<16x96xf32>
    %38 = tpu.matmul %36, %37, %cst_25 {dimension_numbers = #tpu.dot_dimension_numbers<[1], [0], [0], [1], [0, 0, 1, 1], [], []>} : vector<16x16xf32>, vector<16x96xf32>, vector<16x96xf32> -> vector<16x96xf32>
    %39 = vector.broadcast %34 : vector<16x1xf32> to vector<16x16xf32>
    %40 = arith.mulf %22, %39 : vector<16x16xf32>
    %c0_26 = arith.constant 0 : index
    %c0_27 = arith.constant 0 : index
    %41 = vector.load %arg5[%c0_26, %c0_27] : memref<16x96xf32, #tpu.memory_space<vmem>>, vector<16x96xf32>
    %cst_28 = arith.constant dense<0.000000e+00> : vector<16x96xf32>
    %42 = tpu.matmul %40, %41, %cst_28 {dimension_numbers = #tpu.dot_dimension_numbers<[1], [0], [0], [1], [0, 0, 1, 1], [], []>} : vector<16x16xf32>, vector<16x96xf32>, vector<16x96xf32> -> vector<16x96xf32>
    %43 = arith.mulf %38, %38 : vector<16x96xf32>
    %c0_29 = arith.constant 0 : index
    %c0_30 = arith.constant 0 : index
    %44 = vector.load %arg6[%c0_29, %c0_30] : memref<96x64xf32, #tpu.memory_space<vmem>>, vector<96x64xf32>
    %cst_31 = arith.constant dense<0.000000e+00> : vector<16x64xf32>
    %45 = tpu.matmul %43, %44, %cst_31 {dimension_numbers = #tpu.dot_dimension_numbers<[1], [0], [0], [1], [0, 0, 1, 1], [], []>} : vector<16x96xf32>, vector<96x64xf32>, vector<16x64xf32> -> vector<16x64xf32>
    %46 = vector.broadcast %4 : vector<1x64xf32> to vector<16x64xf32>
    %47 = arith.addf %45, %46 : vector<16x64xf32>
    %cst_32 = arith.constant 0.000000e+00 : f32
    %48 = vector.broadcast %cst_32 : f32 to vector<16x64xf32>
    %49 = arith.maximumf %47, %48 : vector<16x64xf32>
    %50 = arith.mulf %42, %42 : vector<16x96xf32>
    %c0_33 = arith.constant 0 : index
    %c0_34 = arith.constant 0 : index
    %51 = vector.load %arg7[%c0_33, %c0_34] : memref<96x64xf32, #tpu.memory_space<vmem>>, vector<96x64xf32>
    %cst_35 = arith.constant dense<0.000000e+00> : vector<16x64xf32>
    %52 = tpu.matmul %50, %51, %cst_35 {dimension_numbers = #tpu.dot_dimension_numbers<[1], [0], [0], [1], [0, 0, 1, 1], [], []>} : vector<16x96xf32>, vector<96x64xf32>, vector<16x64xf32> -> vector<16x64xf32>
    %53 = vector.broadcast %5 : vector<1x64xf32> to vector<16x64xf32>
    %54 = arith.addf %52, %53 : vector<16x64xf32>
    %cst_36 = arith.constant 0.000000e+00 : f32
    %55 = vector.broadcast %cst_36 : f32 to vector<16x64xf32>
    %56 = arith.maximumf %54, %55 : vector<16x64xf32>
    %57 = arith.truncf %49 : vector<16x64xf32> to vector<16x64xbf16>
    %c0_37 = arith.constant 0 : index
    %c0_38 = arith.constant 0 : index
    %58 = vector.load %arg8[%c0_37, %c0_38] : memref<128x128xbf16, #tpu.memory_space<vmem>>, vector<64x128xbf16>
    %cst_39 = arith.constant dense<0.000000e+00> : vector<16x128xf32>
    %59 = tpu.matmul %57, %58, %cst_39 {dimension_numbers = #tpu.dot_dimension_numbers<[1], [0], [0], [1], [0, 0, 1, 1], [], []>} : vector<16x64xbf16>, vector<64x128xbf16>, vector<16x128xf32> -> vector<16x128xf32>
    %60 = arith.truncf %56 : vector<16x64xf32> to vector<16x64xbf16>
    %c64 = arith.constant 64 : index
    %c0_40 = arith.constant 0 : index
    %61 = vector.load %arg8[%c64, %c0_40] : memref<128x128xbf16, #tpu.memory_space<vmem>>, vector<64x128xbf16>
    %cst_41 = arith.constant dense<0.000000e+00> : vector<16x128xf32>
    %62 = tpu.matmul %60, %61, %cst_41 {dimension_numbers = #tpu.dot_dimension_numbers<[1], [0], [0], [1], [0, 0, 1, 1], [], []>} : vector<16x64xbf16>, vector<64x128xbf16>, vector<16x128xf32> -> vector<16x128xf32>
    %63 = arith.addf %59, %62 : vector<16x128xf32>
    %64 = vector.broadcast %1 : vector<1x128xf32> to vector<16x128xf32>
    %65 = arith.addf %63, %64 : vector<16x128xf32>
    %cst_42 = arith.constant 0.000000e+00 : f32
    %66 = vector.broadcast %cst_42 : f32 to vector<16x128xf32>
    %67 = arith.maximumf %65, %66 : vector<16x128xf32>
    %68 = arith.truncf %67 : vector<16x128xf32> to vector<16x128xbf16>
    %c0_43 = arith.constant 0 : index
    %c0_44 = arith.constant 0 : index
    %69 = vector.load %arg9[%c0_43, %c0_44] : memref<128x64xbf16, #tpu.memory_space<vmem>>, vector<128x64xbf16>
    %cst_45 = arith.constant dense<0.000000e+00> : vector<16x64xf32>
    %70 = tpu.matmul %68, %69, %cst_45 {dimension_numbers = #tpu.dot_dimension_numbers<[1], [0], [0], [1], [0, 0, 1, 1], [], []>} : vector<16x128xbf16>, vector<128x64xbf16>, vector<16x64xf32> -> vector<16x64xf32>
    %71 = vector.broadcast %6 : vector<1x64xf32> to vector<16x64xf32>
    %72 = arith.addf %70, %71 : vector<16x64xf32>
    %cst_46 = arith.constant 0.000000e+00 : f32
    %73 = vector.broadcast %cst_46 : f32 to vector<16x64xf32>
    %74 = arith.maximumf %72, %73 : vector<16x64xf32>
    %c0_47 = arith.constant 0 : index
    %c0_48 = arith.constant 0 : index
    %75 = vector.load %arg10[%c0_47, %c0_48] : memref<8x64xf32, #tpu.memory_space<vmem>>, vector<8x64xf32>
    %76 = tpu.transpose %74, [1, 0] : vector<16x64xf32> -> vector<64x16xf32>
    %cst_49 = arith.constant dense<0.000000e+00> : vector<8x16xf32>
    %77 = tpu.matmul %75, %76, %cst_49 {dimension_numbers = #tpu.dot_dimension_numbers<[1], [0], [0], [1], [0, 0, 1, 1], [], []>} : vector<8x64xf32>, vector<64x16xf32>, vector<8x16xf32> -> vector<8x16xf32>
    %78 = vector.extract_strided_slice %77 {offsets = [0, 0], sizes = [1, 16], strides = [1, 1]} : vector<8x16xf32> to vector<1x16xf32>
    %79 = vector.broadcast %7 : vector<1x1xf32> to vector<1x16xf32>
    %80 = arith.addf %78, %79 : vector<1x16xf32>
    %81 = math.tanh %80 : vector<1x16xf32>
    %cst_50 = arith.constant 1.000000e+00 : f32
    %82 = vector.broadcast %cst_50 : f32 to vector<1x16xf32>
    %83 = arith.addf %81, %82 : vector<1x16xf32>
    %cst_51 = arith.constant 5.000000e-01 : f32
    %84 = vector.broadcast %cst_51 : f32 to vector<1x16xf32>
    %85 = arith.mulf %83, %84 : vector<1x16xf32>
    %cst_52 = arith.constant 1.500000e+01 : f32
    %86 = vector.broadcast %cst_52 : f32 to vector<1x16xf32>
    %87 = arith.mulf %85, %86 : vector<1x16xf32>
    %cst_53 = arith.constant 1.000000e+00 : f32
    %88 = vector.broadcast %cst_53 : f32 to vector<1x16xf32>
    %89 = arith.addf %87, %88 : vector<1x16xf32>
    %c0_54 = arith.constant 0 : index
    %c0_55 = arith.constant 0 : index
    %90 = vector.load %arg12[%c0_54, %c0_55] : memref<1x16xf32, #tpu.memory_space<vmem>>, vector<1x16xf32>
    tpu.vector_store %arg12[%c0_54, %c0_55], %89 {strides = array<i32>} : memref<1x16xf32, #tpu.memory_space<vmem>>, vector<1x16xf32>,
    return
  }
  func.func @transform_0(%arg0: i32) -> (i32, i32) {
    %c0_i32 = arith.constant 0 : i32
    %c0_i32_0 = arith.constant 0 : i32
    return %arg0, %c0_i32 : i32, i32
  }
  func.func @transform_1(%arg0: i32) -> (i32, i32) {
    %c0_i32 = arith.constant 0 : i32
    %c0_i32_0 = arith.constant 0 : i32
    %c0_i32_1 = arith.constant 0 : i32
    return %c0_i32, %c0_i32_0 : i32, i32
  }
  func.func @transform_2(%arg0: i32) -> (i32, i32) {
    %c0_i32 = arith.constant 0 : i32
    %c0_i32_0 = arith.constant 0 : i32
    %c0_i32_1 = arith.constant 0 : i32
    return %c0_i32, %c0_i32_0 : i32, i32
  }
  func.func @transform_3(%arg0: i32) -> (i32, i32) {
    %c0_i32 = arith.constant 0 : i32
    %c0_i32_0 = arith.constant 0 : i32
    %c0_i32_1 = arith.constant 0 : i32
    return %c0_i32, %c0_i32_0 : i32, i32
  }
  func.func @transform_4(%arg0: i32) -> (i32, i32) {
    %c0_i32 = arith.constant 0 : i32
    %c0_i32_0 = arith.constant 0 : i32
    %c0_i32_1 = arith.constant 0 : i32
    return %c0_i32, %c0_i32_0 : i32, i32
  }
  func.func @transform_5(%arg0: i32) -> (i32, i32) {
    %c0_i32 = arith.constant 0 : i32
    %c0_i32_0 = arith.constant 0 : i32
    %c0_i32_1 = arith.constant 0 : i32
    return %c0_i32, %c0_i32_0 : i32, i32
  }
  func.func @transform_6(%arg0: i32) -> (i32, i32) {
    %c0_i32 = arith.constant 0 : i32
    %c0_i32_0 = arith.constant 0 : i32
    %c0_i32_1 = arith.constant 0 : i32
    return %c0_i32, %c0_i32_0 : i32, i32
  }
  func.func @transform_7(%arg0: i32) -> (i32, i32) {
    %c0_i32 = arith.constant 0 : i32
    %c0_i32_0 = arith.constant 0 : i32
    %c0_i32_1 = arith.constant 0 : i32
    return %c0_i32, %c0_i32_0 : i32, i32
  }
  func.func @transform_8(%arg0: i32) -> (i32, i32) {
    %c0_i32 = arith.constant 0 : i32
    %c0_i32_0 = arith.constant 0 : i32
    %c0_i32_1 = arith.constant 0 : i32
    return %c0_i32, %c0_i32_0 : i32, i32
  }
  func.func @transform_9(%arg0: i32) -> (i32, i32) {
    %c0_i32 = arith.constant 0 : i32
    %c0_i32_0 = arith.constant 0 : i32
    %c0_i32_1 = arith.constant 0 : i32
    return %c0_i32, %c0_i32_0 : i32, i32
  }
  func.func @transform_10(%arg0: i32) -> (i32, i32) {
    %c0_i32 = arith.constant 0 : i32
    %c0_i32_0 = arith.constant 0 : i32
    %c0_i32_1 = arith.constant 0 : i32
    return %c0_i32, %c0_i32_0 : i32, i32
  }
  func.func @transform_11(%arg0: i32) -> (i32, i32) {
    %c0_i32 = arith.constant 0 : i32
    %c0_i32_0 = arith.constant 0 : i32
    return %c0_i32, %arg0 : i32, i32
  }
}

</mosaic_0001>

<llo_original>
// kernel: tpu_custom_call.1
$region0: #{tpu_custom_call.1}
  #allocation0 [shape = 'u32[]', space=smem, size = 0x4, offset = 0x4, fixed_abs, tag = 'smem constant byte address 0x4 - core index']
  #allocation1 [shape = 'u32[144,128]{1,0:T(1,128)}', space=vmem, size = 0x12000, scoped, tag = 'internal scratch']
  %s0 = inlined_call_operand.vmem [shape: bf16[16,256], index: 0, kind: input, shape index: {}]
  %s1 = inlined_call_operand.vmem [shape: bf16[256,128], index: 1, kind: input, shape index: {}]
  %s2 = inlined_call_operand.vmem [shape: f32[128,16], index: 2, kind: input, shape index: {}]
  %s3 = inlined_call_operand.vmem [shape: f32[128,16], index: 3, kind: input, shape index: {}]
  %s4 = inlined_call_operand.vmem [shape: f32[16,96], index: 4, kind: input, shape index: {}]
  %s5 = inlined_call_operand.vmem [shape: f32[96,64], index: 5, kind: input, shape index: {}]
  %s6 = inlined_call_operand.vmem [shape: f32[96,64], index: 6, kind: input, shape index: {}]
  %s7 = inlined_call_operand.vmem [shape: bf16[128,128], index: 7, kind: input, shape index: {}]
  %s8 = inlined_call_operand.vmem [shape: bf16[128,64], index: 8, kind: input, shape index: {}]
  %s9 = inlined_call_operand.vmem [shape: f32[8,64], index: 9, kind: input, shape index: {}]
  %s10 = inlined_call_operand.vmem [shape: f32[8,128], index: 10, kind: input, shape index: {}]
  %s11 = inlined_call_operand.hbm [shape: f32[1,16], index: 11, kind: output, shape index: {}]
  %s12 = sld [smem:[#allocation0]]
  $region54: #{tpu_custom_call.1} parent=0
    _
  %s14 = ssub.s32 1, %s12
  %s15 = scalar_select 0, %s14, %s12
  $region1: #{tpu_custom_call.1} parent=0
    #allocation2 [shape = 'u8[512]{0}', space=vmem, size = 0x400, scoped, tag = 'output window, operand 0, single buffered']
    #allocation3 [shape = 's32[1]{0}', space=sflag, size = 0x4, scoped, tag = 'scoped memory for tpu_custom_call.1']
    %16 = vsyncpa [#allocation3], 0
    // Predicated region
    $region2: #{tpu_custom_call.1} parent=1 // pred_check
      _
    $region3: #{tpu_custom_call.1} parent=1 // pred_check_branch
      %18 = sbr.rel (0) target = $region5
    $region4: #{tpu_custom_call.1} parent=1 // pred_region
      _
    $region5: #{tpu_custom_call.1} parent=1 // pred_fallthru
      _
    // Predicated region
    $region6: #{tpu_custom_call.1} parent=1 // pred_check
      _
    $region7: #{tpu_custom_call.1} parent=1 // pred_check_branch
      %20 = sbr.rel (0) target = $region9
    $region8: #{tpu_custom_call.1} parent=1 // pred_region
      _
    $region9: #{tpu_custom_call.1} parent=1 // pred_fallthru
      _
    // Predicated region
    $region10: #{tpu_custom_call.1} parent=1 // pred_check
      _
    $region11: #{tpu_custom_call.1} parent=1 // pred_check_branch
      %22 = sbr.rel (0) target = $region13
    $region12: #{tpu_custom_call.1} parent=1 // pred_region
      _
    $region13: #{tpu_custom_call.1} parent=1 // pred_fallthru
      _
    // Predicated region
    $region14: #{tpu_custom_call.1} parent=1 // pred_check
      _
    $region15: #{tpu_custom_call.1} parent=1 // pred_check_branch
      %24 = sbr.rel (0) target = $region17
    $region16: #{tpu_custom_call.1} parent=1 // pred_region
      _
    $region17: #{tpu_custom_call.1} parent=1 // pred_fallthru
      _
    // Predicated region
    $region18: #{tpu_custom_call.1} parent=1 // pred_check
      _
    $region19: #{tpu_custom_call.1} parent=1 // pred_check_branch
      %26 = sbr.rel (0) target = $region21
    $region20: #{tpu_custom_call.1} parent=1 // pred_region
      _
    $region21: #{tpu_custom_call.1} parent=1 // pred_fallthru
      _
    // Predicated region
    $region22: #{tpu_custom_call.1} parent=1 // pred_check
      _
    $region23: #{tpu_custom_call.1} parent=1 // pred_check_branch
      %28 = sbr.rel (0) target = $region25
    $region24: #{tpu_custom_call.1} parent=1 // pred_region
      _
    $region25: #{tpu_custom_call.1} parent=1 // pred_fallthru
      _
    // Predicated region
    $region26: #{tpu_custom_call.1} parent=1 // pred_check
      _
    $region27: #{tpu_custom_call.1} parent=1 // pred_check_branch
      %30 = sbr.rel (0) target = $region29
    $region28: #{tpu_custom_call.1} parent=1 // pred_region
      _
    $region29: #{tpu_custom_call.1} parent=1 // pred_fallthru
      _
    // Predicated region
    $region30: #{tpu_custom_call.1} parent=1 // pred_check
      _
    $region31: #{tpu_custom_call.1} parent=1 // pred_check_branch
      %32 = sbr.rel (0) target = $region33
    $region32: #{tpu_custom_call.1} parent=1 // pred_region
      _
    $region33: #{tpu_custom_call.1} parent=1 // pred_fallthru
      _
    // Predicated region
    $region34: #{tpu_custom_call.1} parent=1 // pred_check
      _
    $region35: #{tpu_custom_call.1} parent=1 // pred_check_branch
      %34 = sbr.rel (0) target = $region37
    $region36: #{tpu_custom_call.1} parent=1 // pred_region
      _
    $region37: #{tpu_custom_call.1} parent=1 // pred_fallthru
      _
    // Predicated region
    $region38: #{tpu_custom_call.1} parent=1 // pred_check
      _
    $region39: #{tpu_custom_call.1} parent=1 // pred_check_branch
      %36 = sbr.rel (0) target = $region41
    $region40: #{tpu_custom_call.1} parent=1 // pred_region
      _
    $region41: #{tpu_custom_call.1} parent=1 // pred_fallthru
      _
    // Predicated region
    $region42: #{tpu_custom_call.1} parent=1 // pred_check
      _
    $region43: #{tpu_custom_call.1} parent=1 // pred_check_branch
      %38 = sbr.rel (0) target = $region45
    $region44: #{tpu_custom_call.1} parent=1 // pred_region
      _
    $region45: #{tpu_custom_call.1} parent=1 // pred_fallthru
      _
    %v40 = vld [vmem:[%s10] sm:$0x1]
    %v41 = vld [vmem:[%s10 + $0x1] sm:$0x1]
    %v42 = vld [vmem:[%s10 + $0x2] sm:$0x1]
    %v43 = vld [vmem:[%s10 + $0x3] sm:$0x1]
    %v44 = vld [vmem:[%s10 + $0x4] sm:$0x1]
    %v45 = vld [vmem:[%s10 + $0x5] sm:$0x1]
    %v46 = vld [vmem:[%s10 + $0x6] sm:$0x1]
    %v47 = vld [vmem:[%s10 + $0x7] sm:$0x1]
    %v48 = vld [vmem:[%s0] sm:$0xff]
    %v49 = vld [vmem:[%s0 + $0x8] sm:$0xff]
    %v50 = vld [vmem:[%s1] sm:$0xf]
    %v51 = vld [vmem:[%s1 + $0x4] sm:$0xf]
    %v52 = vld [vmem:[%s1 + $0x8] sm:$0xf]
    %v53 = vld [vmem:[%s1 + $0xc] sm:$0xf]
    %v54 = vld [vmem:[%s1 + $0x10] sm:$0xf]
    %v55 = vld [vmem:[%s1 + $0x14] sm:$0xf]
    %v56 = vld [vmem:[%s1 + $0x18] sm:$0xf]
    %v57 = vld [vmem:[%s1 + $0x1c] sm:$0xf]
    %v58 = vld [vmem:[%s1 + $0x20] sm:$0xf]
    %v59 = vld [vmem:[%s1 + $0x24] sm:$0xf]
    %v60 = vld [vmem:[%s1 + $0x28] sm:$0xf]
    %v61 = vld [vmem:[%s1 + $0x2c] sm:$0xf]
    %v62 = vld [vmem:[%s1 + $0x30] sm:$0xf]
    %v63 = vld [vmem:[%s1 + $0x34] sm:$0xf]
    %v64 = vld [vmem:[%s1 + $0x38] sm:$0xf]
    %v65 = vld [vmem:[%s1 + $0x3c] sm:$0xf]
    %v66 = vld [vmem:[%s1 + $0x40] sm:$0xf]
    %v67 = vld [vmem:[%s1 + $0x44] sm:$0xf]
    %v68 = vld [vmem:[%s1 + $0x48] sm:$0xf]
    %v69 = vld [vmem:[%s1 + $0x4c] sm:$0xf]
    %v70 = vld [vmem:[%s1 + $0x50] sm:$0xf]
    %v71 = vld [vmem:[%s1 + $0x54] sm:$0xf]
    %v72 = vld [vmem:[%s1 + $0x58] sm:$0xf]
    %v73 = vld [vmem:[%s1 + $0x5c] sm:$0xf]
    %v74 = vld [vmem:[%s1 + $0x60] sm:$0xf]
    %v75 = vld [vmem:[%s1 + $0x64] sm:$0xf]
    %v76 = vld [vmem:[%s1 + $0x68] sm:$0xf]
    %v77 = vld [vmem:[%s1 + $0x6c] sm:$0xf]
    %v78 = vld [vmem:[%s1 + $0x70] sm:$0xf]
    %v79 = vld [vmem:[%s1 + $0x74] sm:$0xf]
    %v80 = vld [vmem:[%s1 + $0x78] sm:$0xf]
    %v81 = vld [vmem:[%s1 + $0x7c] sm:$0xf]
    %v82 = vlaneseq
    %v83 = vshrl.u32 %v82, 7
    %v84 = vsub.s32 0, %v83
    %v85 = vrot.slane %v40, %v84
    %v88 = vunpack.c.l.b16 %v48
    %v89 = vunpack.c.h.b16 %v48
    %v90 = vunpack.c.l.b16 %v49
    %v91 = vunpack.c.h.b16 %v49
    %v92 = vpack.c.b16 %v90, %v88
    %v93 = vpack.c.b16 %v91, %v89
    %v128 = vunpack.c.l.b16 %v50
    %v129 = vunpack.c.l.b16 %v51
    %v130 = vunpack.c.l.b16 %v52
    %v131 = vunpack.c.l.b16 %v53
    %v132 = vunpack.c.l.b16 %v54
    %v133 = vunpack.c.l.b16 %v55
    %v134 = vunpack.c.l.b16 %v56
    %v135 = vunpack.c.l.b16 %v57
    %v136 = vunpack.c.l.b16 %v58
    %v137 = vunpack.c.l.b16 %v59
    %v138 = vunpack.c.l.b16 %v60
    %v139 = vunpack.c.l.b16 %v61
    %v140 = vunpack.c.l.b16 %v62
    %v141 = vunpack.c.l.b16 %v63
    %v142 = vunpack.c.l.b16 %v64
    %v143 = vunpack.c.l.b16 %v65
    %v144 = vunpack.c.l.b16 %v66
    %v145 = vunpack.c.l.b16 %v67
    %v146 = vunpack.c.l.b16 %v68
    %v147 = vunpack.c.l.b16 %v69
    %v148 = vunpack.c.l.b16 %v70
    %v149 = vunpack.c.l.b16 %v71
    %v150 = vunpack.c.l.b16 %v72
    %v151 = vunpack.c.l.b16 %v73
    %v152 = vunpack.c.l.b16 %v74
    %v153 = vunpack.c.l.b16 %v75
    %v154 = vunpack.c.l.b16 %v76
    %v155 = vunpack.c.l.b16 %v77
    %v156 = vunpack.c.l.b16 %v78
    %v157 = vunpack.c.l.b16 %v79
    %v158 = vunpack.c.l.b16 %v80
    %v159 = vunpack.c.l.b16 %v81
    %v160 = vpack.c.b16 %v129, %v128
    %v161 = vpack.c.b16 %v131, %v130
    %v162 = vpack.c.b16 %v133, %v132
    %v163 = vpack.c.b16 %v135, %v134
    %v164 = vpack.c.b16 %v137, %v136
    %v165 = vpack.c.b16 %v139, %v138
    %v166 = vpack.c.b16 %v141, %v140
    %v167 = vpack.c.b16 %v143, %v142
    %v168 = vpack.c.b16 %v145, %v144
    %v169 = vpack.c.b16 %v147, %v146
    %v170 = vpack.c.b16 %v149, %v148
    %v171 = vpack.c.b16 %v151, %v150
    %v172 = vpack.c.b16 %v153, %v152
    %v173 = vpack.c.b16 %v155, %v154
    %v174 = vpack.c.b16 %v157, %v156
    %v175 = vpack.c.b16 %v159, %v158
    %192 = vmatprep.subr.bf16.mxu0 0
    %193 = vmatpush1.bf16.msra.mxu0 %v160
    %194 = vmatprep.subr.bf16.mxu0 0
    %195 = vmatpush1.bf16.msra.mxu0 %v161
    %196 = vmatprep.subr.bf16.mxu0 0
    %197 = vmatpush1.bf16.msra.mxu0 %v162
    %198 = vmatprep.subr.bf16.mxu0 0
    %199 = vmatpush1.bf16.msra.mxu0 %v163
    %200 = vmatprep.subr.bf16.mxu0 0
    %201 = vmatpush1.bf16.msra.mxu0 %v164
    %202 = vmatprep.subr.bf16.mxu0 0
    %203 = vmatpush1.bf16.msra.mxu0 %v165
    %204 = vmatprep.subr.bf16.mxu0 0
    %205 = vmatpush1.bf16.msra.mxu0 %v166
    %206 = vmatprep.subr.bf16.mxu0 0
    %207 = vmatpush1.bf16.msra.mxu0 %v167
    %208 = vmatprep.subr.bf16.mxu0 0
    %209 = vmatpush1.bf16.msra.mxu0 %v168
    %210 = vmatprep.subr.bf16.mxu0 0
    %211 = vmatpush1.bf16.msra.mxu0 %v169
    %212 = vmatprep.subr.bf16.mxu0 0
    %213 = vmatpush1.bf16.msra.mxu0 %v170
    %214 = vmatprep.subr.bf16.mxu0 0
    %215 = vmatpush1.bf16.msra.mxu0 %v171
    %216 = vmatprep.subr.bf16.mxu0 0
    %217 = vmatpush1.bf16.msra.mxu0 %v172
    %218 = vmatprep.subr.bf16.mxu0 0
    %219 = vmatpush1.bf16.msra.mxu0 %v173
    %220 = vmatprep.subr.bf16.mxu0 0
    %221 = vmatpush1.bf16.msra.mxu0 %v174
    %222 = vmatprep.subr.bf16.mxu0 0
    %223 = vmatpush1.bf16.msra.mxu0 %v175
    %224 = vmatprep.mubr.bf16.mxu0 %v93
    %225 = vmatmul.mubr.bf16.gmra.mrb[0].mxu0 %v92
    %v226 = vpop.f32.mrb[0].mxu0
    %v227 = vadd.f32 %v85, %v226
    %v228 = vpop.f32.mrb[0].mxu0
    %v229 = vpop.f32.mrb[0].mxu0
    %v230 = vadd.f32 %v85, %v229
    %v231 = vpop.f32.mrb[0].mxu0
    %232 = vdwg.mxu0
    %v233 = vmax.f32 %v227, 0.0
    %v234 = vmax.f32 %v230, 0.0
    %v235 = vld [vmem:[%s2] sm:$0xff]
    %v236 = vld [vmem:[%s2 + $0x8] sm:$0xff]
    %v237 = vld [vmem:[%s2 + $0x10] sm:$0xff]
    %v238 = vld [vmem:[%s2 + $0x18] sm:$0xff]
    %v239 = vld [vmem:[%s2 + $0x20] sm:$0xff]
    %v240 = vld [vmem:[%s2 + $0x28] sm:$0xff]
    %v241 = vld [vmem:[%s2 + $0x30] sm:$0xff]
    %v242 = vld [vmem:[%s2 + $0x38] sm:$0xff]
    %v243 = vld [vmem:[%s2 + $0x40] sm:$0xff]
    %v244 = vld [vmem:[%s2 + $0x48] sm:$0xff]
    %v245 = vld [vmem:[%s2 + $0x50] sm:$0xff]
    %v246 = vld [vmem:[%s2 + $0x58] sm:$0xff]
    %v247 = vld [vmem:[%s2 + $0x60] sm:$0xff]
    %v248 = vld [vmem:[%s2 + $0x68] sm:$0xff]
    %v249 = vld [vmem:[%s2 + $0x70] sm:$0xff]
    %v250 = vld [vmem:[%s2 + $0x78] sm:$0xff]
    %v251 = vlaneseq
    %v252 = vshrl.u32 %v251, 7
    %v253 = vsub.s32 0, %v252
    %v254 = vrot.slane %v42, %v253
    %255 = vmatprep.subr.mxu0 0.0
    %256 = vmatpush1.msra.mxu0 %v235
    %257 = vmatprep.subr.mxu0 0.0
    %258 = vmatpush1.msra.mxu0 %v236
    %259 = vmatprep.subr.mxu0 0.0
    %260 = vmatpush1.msra.mxu0 %v237
    %261 = vmatprep.subr.mxu0 0.0
    %262 = vmatpush1.msra.mxu0 %v238
    %263 = vmatprep.subr.mxu0 0.0
    %264 = vmatpush1.msra.mxu0 %v239
    %265 = vmatprep.subr.mxu0 0.0
    %266 = vmatpush1.msra.mxu0 %v240
    %267 = vmatprep.subr.mxu0 0.0
    %268 = vmatpush1.msra.mxu0 %v241
    %269 = vmatprep.subr.mxu0 0.0
    %270 = vmatpush1.msra.mxu0 %v242
    %271 = vmatprep.subr.mxu0 0.0
    %272 = vmatpush1.msra.mxu0 %v243
    %273 = vmatprep.subr.mxu0 0.0
    %274 = vmatpush1.msra.mxu0 %v244
    %275 = vmatprep.subr.mxu0 0.0
    %276 = vmatpush1.msra.mxu0 %v245
    %277 = vmatprep.subr.mxu0 0.0
    %278 = vmatpush1.msra.mxu0 %v246
    %279 = vmatprep.subr.mxu0 0.0
    %280 = vmatpush1.msra.mxu0 %v247
    %281 = vmatprep.subr.mxu0 0.0
    %282 = vmatpush1.msra.mxu0 %v248
    %283 = vmatprep.subr.mxu0 0.0
    %284 = vmatpush1.msra.mxu0 %v249
    %285 = vmatprep.subr.mxu0 0.0
    %286 = vmatpush1.msra.mxu0 %v250
    %287 = vmatprep.subr.mxu0 0.0
    %288 = vmatpush1.msra.mxu0 0.0
    %289 = vmatprep.subr.mxu0 0.0
    %290 = vmatpush1.msra.mxu0 0.0
    %291 = vmatprep.subr.mxu0 0.0
    %292 = vmatpush1.msra.mxu0 0.0
    %293 = vmatprep.subr.mxu0 0.0
    %294 = vmatpush1.msra.mxu0 0.0
    %295 = vmatprep.subr.mxu0 0.0
    %296 = vmatpush1.msra.mxu0 0.0
    %297 = vmatprep.subr.mxu0 0.0
    %298 = vmatpush1.msra.mxu0 0.0
    %299 = vmatprep.subr.mxu0 0.0
    %300 = vmatpush1.msra.mxu0 0.0
    %301 = vmatprep.subr.mxu0 0.0
    %302 = vmatpush1.msra.mxu0 0.0
    %303 = vmatprep.subr.mxu0 0.0
    %304 = vmatpush1.msra.mxu0 0.0
    %305 = vmatprep.subr.mxu0 0.0
    %306 = vmatpush1.msra.mxu0 0.0
    %307 = vmatprep.subr.mxu0 0.0
    %308 = vmatpush1.msra.mxu0 0.0
    %309 = vmatprep.subr.mxu0 0.0
    %310 = vmatpush1.msra.mxu0 0.0
    %311 = vmatprep.subr.mxu0 0.0
    %312 = vmatpush1.msra.mxu0 0.0
    %313 = vmatprep.subr.mxu0 0.0
    %314 = vmatpush1.msra.mxu0 0.0
    %315 = vmatprep.subr.mxu0 0.0
    %316 = vmatpush1.msra.mxu0 0.0
    %317 = vmatprep.subr.mxu0 0.0
    %318 = vmatpush1.msra.mxu0 0.0
    %319 = vmatprep.mubr.f32.mxu0 0.0
    %320 = vmatmul.mubr.f32.gmra.mrb[0].mxu0 %v233
    %v321 = vpop.f32.mrb[0].mxu0
    %v322 = vadd.f32 %v254, %v321
    %v323 = vpop.f32.mrb[0].mxu0
    %324 = vmatprep.mubr.f32.mxu0 0.0
    %325 = vmatmul.mubr.f32.gmra.mrb[0].mxu0 %v234
    %v326 = vpop.f32.mrb[0].mxu0
    %v327 = vadd.f32 %v254, %v326
    %v328 = vpop.f32.mrb[0].mxu0
    %329 = vdwg.mxu0
    %v330 = vld [vmem:[%s3] sm:$0xff]
    %v331 = vld [vmem:[%s3 + $0x8] sm:$0xff]
    %v332 = vld [vmem:[%s3 + $0x10] sm:$0xff]
    %v333 = vld [vmem:[%s3 + $0x18] sm:$0xff]
    %v334 = vld [vmem:[%s3 + $0x20] sm:$0xff]
    %v335 = vld [vmem:[%s3 + $0x28] sm:$0xff]
    %v336 = vld [vmem:[%s3 + $0x30] sm:$0xff]
    %v337 = vld [vmem:[%s3 + $0x38] sm:$0xff]
    %v338 = vld [vmem:[%s3 + $0x40] sm:$0xff]
    %v339 = vld [vmem:[%s3 + $0x48] sm:$0xff]
    %v340 = vld [vmem:[%s3 + $0x50] sm:$0xff]
    %v341 = vld [vmem:[%s3 + $0x58] sm:$0xff]
    %v342 = vld [vmem:[%s3 + $0x60] sm:$0xff]
    %v343 = vld [vmem:[%s3 + $0x68] sm:$0xff]
    %v344 = vld [vmem:[%s3 + $0x70] sm:$0xff]
    %v345 = vld [vmem:[%s3 + $0x78] sm:$0xff]
    %v346 = vlaneseq
    %v347 = vshrl.u32 %v346, 7
    %v348 = vsub.s32 0, %v347
    %v349 = vrot.slane %v43, %v348
    %350 = vmatprep.subr.mxu0 0.0
    %351 = vmatpush1.msra.mxu0 %v330
    %352 = vmatprep.subr.mxu0 0.0
    %353 = vmatpush1.msra.mxu0 %v331
    %354 = vmatprep.subr.mxu0 0.0
    %355 = vmatpush1.msra.mxu0 %v332
    %356 = vmatprep.subr.mxu0 0.0
    %357 = vmatpush1.msra.mxu0 %v333
    %358 = vmatprep.subr.mxu0 0.0
    %359 = vmatpush1.msra.mxu0 %v334
    %360 = vmatprep.subr.mxu0 0.0
    %361 = vmatpush1.msra.mxu0 %v335
    %362 = vmatprep.subr.mxu0 0.0
    %363 = vmatpush1.msra.mxu0 %v336
    %364 = vmatprep.subr.mxu0 0.0
    %365 = vmatpush1.msra.mxu0 %v337
    %366 = vmatprep.subr.mxu0 0.0
    %367 = vmatpush1.msra.mxu0 %v338
    %368 = vmatprep.subr.mxu0 0.0
    %369 = vmatpush1.msra.mxu0 %v339
    %370 = vmatprep.subr.mxu0 0.0
    %371 = vmatpush1.msra.mxu0 %v340
    %372 = vmatprep.subr.mxu0 0.0
    %373 = vmatpush1.msra.mxu0 %v341
    %374 = vmatprep.subr.mxu0 0.0
    %375 = vmatpush1.msra.mxu0 %v342
    %376 = vmatprep.subr.mxu0 0.0
    %377 = vmatpush1.msra.mxu0 %v343
    %378 = vmatprep.subr.mxu0 0.0
    %379 = vmatpush1.msra.mxu0 %v344
    %380 = vmatprep.subr.mxu0 0.0
    %381 = vmatpush1.msra.mxu0 %v345
    %382 = vmatprep.subr.mxu0 0.0
    %383 = vmatpush1.msra.mxu0 0.0
    %384 = vmatprep.subr.mxu0 0.0
    %385 = vmatpush1.msra.mxu0 0.0
    %386 = vmatprep.subr.mxu0 0.0
    %387 = vmatpush1.msra.mxu0 0.0
    %388 = vmatprep.subr.mxu0 0.0
    %389 = vmatpush1.msra.mxu0 0.0
    %390 = vmatprep.subr.mxu0 0.0
    %391 = vmatpush1.msra.mxu0 0.0
    %392 = vmatprep.subr.mxu0 0.0
    %393 = vmatpush1.msra.mxu0 0.0
    %394 = vmatprep.subr.mxu0 0.0
    %395 = vmatpush1.msra.mxu0 0.0
    %396 = vmatprep.subr.mxu0 0.0
    %397 = vmatpush1.msra.mxu0 0.0
    %398 = vmatprep.subr.mxu0 0.0
    %399 = vmatpush1.msra.mxu0 0.0
    %400 = vmatprep.subr.mxu0 0.0
    %401 = vmatpush1.msra.mxu0 0.0
    %402 = vmatprep.subr.mxu0 0.0
    %403 = vmatpush1.msra.mxu0 0.0
    %404 = vmatprep.subr.mxu0 0.0
    %405 = vmatpush1.msra.mxu0 0.0
    %406 = vmatprep.subr.mxu0 0.0
    %407 = vmatpush1.msra.mxu0 0.0
    %408 = vmatprep.subr.mxu0 0.0
    %409 = vmatpush1.msra.mxu0 0.0
    %410 = vmatprep.subr.mxu0 0.0
    %411 = vmatpush1.msra.mxu0 0.0
    %412 = vmatprep.subr.mxu0 0.0
    %413 = vmatpush1.msra.mxu0 0.0
    %414 = vmatprep.mubr.f32.mxu0 0.0
    %415 = vmatmul.mubr.f32.gmra.mrb[0].mxu0 %v233
    %v416 = vpop.f32.mrb[0].mxu0
    %v417 = vadd.f32 %v349, %v416
    %v418 = vpop.f32.mrb[0].mxu0
    %419 = vmatprep.mubr.f32.mxu0 0.0
    %420 = vmatmul.mubr.f32.gmra.mrb[0].mxu0 %v234
    %v421 = vpop.f32.mrb[0].mxu0
    %v422 = vadd.f32 %v349, %v421
    %v423 = vpop.f32.mrb[0].mxu0
    %424 = vdwg.mxu0
    %v425 = vmul.f32 %v322, %v322
    %v426 = vmul.f32 %v327, %v327
    %vm427 = vcmask 130048
    %v428 = vsel %vm427, %v425, 0.0
    %429 = vadd.xlane.f32.xlu0 %v428
    %v430 = vpop.xlane.xlu0 %429
    %v431 = vsel %vm427, %v426, 0.0
    %432 = vadd.xlane.f32.xlu0 %v431
    %v433 = vpop.xlane.xlu0 %432
    %v434 = vadd.f32 %v430, 1e-12
    %v435 = vadd.f32 %v433, 1e-12
    %v436 = vrsqrt.pop %v434
    %v437 = vrsqrt.pop %v435
    %v438 = vmul.f32 %v417, %v417
    %v439 = vmul.f32 %v422, %v422
    %v440 = vsel %vm427, %v438, 0.0
    %441 = vadd.xlane.f32.xlu0 %v440
    %v442 = vpop.xlane.xlu0 %441
    %v443 = vsel %vm427, %v439, 0.0
    %444 = vadd.xlane.f32.xlu0 %v443
    %v445 = vpop.xlane.xlu0 %444
    %v446 = vadd.f32 %v442, 1e-12
    %v447 = vadd.f32 %v445, 1e-12
    %v448 = vrsqrt.pop %v446
    %v449 = vrsqrt.pop %v447
    %v450 = vmul.f32 %v322, %v436
    %v451 = vmul.f32 %v327, %v437
    %v452 = vld [vmem:[%s4] sm:$0xff]
    %v453 = vld [vmem:[%s4 + $0x8] sm:$0xff]
    %v455 = vsel %vm427, %v450, 0
    %v458 = vsel %vm427, %v451, 0
    %460 = vmatprep.subr.mxu0 0.0
    %461 = vmatpush1.msra.mxu0 %v452
    %462 = vmatprep.subr.mxu0 0.0
    %463 = vmatpush1.msra.mxu0 %v453
    %464 = vmatprep.subr.mxu0 0.0
    %465 = vmatpush1.msra.mxu0 0.0
    %466 = vmatprep.subr.mxu0 0.0
    %467 = vmatpush1.msra.mxu0 0.0
    %468 = vmatprep.subr.mxu0 0.0
    %469 = vmatpush1.msra.mxu0 0.0
    %470 = vmatprep.subr.mxu0 0.0
    %471 = vmatpush1.msra.mxu0 0.0
    %472 = vmatprep.subr.mxu0 0.0
    %473 = vmatpush1.msra.mxu0 0.0
    %474 = vmatprep.subr.mxu0 0.0
    %475 = vmatpush1.msra.mxu0 0.0
    %476 = vmatprep.subr.mxu0 0.0
    %477 = vmatpush1.msra.mxu0 0.0
    %478 = vmatprep.subr.mxu0 0.0
    %479 = vmatpush1.msra.mxu0 0.0
    %480 = vmatprep.subr.mxu0 0.0
    %481 = vmatpush1.msra.mxu0 0.0
    %482 = vmatprep.subr.mxu0 0.0
    %483 = vmatpush1.msra.mxu0 0.0
    %484 = vmatprep.subr.mxu0 0.0
    %485 = vmatpush1.msra.mxu0 0.0
    %486 = vmatprep.subr.mxu0 0.0
    %487 = vmatpush1.msra.mxu0 0.0
    %488 = vmatprep.subr.mxu0 0.0
    %489 = vmatpush1.msra.mxu0 0.0
    %490 = vmatprep.subr.mxu0 0.0
    %491 = vmatpush1.msra.mxu0 0.0
    %492 = vmatprep.subr.mxu0 0.0
    %493 = vmatpush1.msra.mxu0 0.0
    %494 = vmatprep.subr.mxu0 0.0
    %495 = vmatpush1.msra.mxu0 0.0
    %496 = vmatprep.subr.mxu0 0.0
    %497 = vmatpush1.msra.mxu0 0.0
    %498 = vmatprep.subr.mxu0 0.0
    %499 = vmatpush1.msra.mxu0 0.0
    %500 = vmatprep.subr.mxu0 0.0
    %501 = vmatpush1.msra.mxu0 0.0
    %502 = vmatprep.subr.mxu0 0.0
    %503 = vmatpush1.msra.mxu0 0.0
    %504 = vmatprep.subr.mxu0 0.0
    %505 = vmatpush1.msra.mxu0 0.0
    %506 = vmatprep.subr.mxu0 0.0
    %507 = vmatpush1.msra.mxu0 0.0
    %508 = vmatprep.subr.mxu0 0.0
    %509 = vmatpush1.msra.mxu0 0.0
    %510 = vmatprep.subr.mxu0 0.0
    %511 = vmatpush1.msra.mxu0 0.0
    %512 = vmatprep.subr.mxu0 0.0
    %513 = vmatpush1.msra.mxu0 0.0
    %514 = vmatprep.subr.mxu0 0.0
    %515 = vmatpush1.msra.mxu0 0.0
    %516 = vmatprep.subr.mxu0 0.0
    %517 = vmatpush1.msra.mxu0 0.0
    %518 = vmatprep.subr.mxu0 0.0
    %519 = vmatpush1.msra.mxu0 0.0
    %520 = vmatprep.subr.mxu0 0.0
    %521 = vmatpush1.msra.mxu0 0.0
    %522 = vmatprep.subr.mxu0 0.0
    %523 = vmatpush1.msra.mxu0 0.0
    %524 = vmatprep.mubr.f32.mxu0 0.0
    %525 = vmatmul.mubr.f32.gmra.mrb[0].mxu0 %v455
    %v526 = vpop.f32.mrb[0].mxu0
    %v527 = vadd.f32 0.0, %v526
    %v528 = vpop.f32.mrb[0].mxu0
    %529 = vmatprep.mubr.f32.mxu0 0.0
    %530 = vmatmul.mubr.f32.gmra.mrb[0].mxu0 %v458
    %v531 = vpop.f32.mrb[0].mxu0
    %v532 = vadd.f32 0.0, %v531
    %v533 = vpop.f32.mrb[0].mxu0
    %534 = vdwg.mxu0
    %v535 = vmul.f32 %v417, %v448
    %v536 = vmul.f32 %v422, %v449
    %v538 = vsel %vm427, %v535, 0
    %v541 = vsel %vm427, %v536, 0
    %543 = vmatprep.subr.mxu0 0.0
    %544 = vmatpush1.msra.mxu0 %v452
    %545 = vmatprep.subr.mxu0 0.0
    %546 = vmatpush1.msra.mxu0 %v453
    %547 = vmatprep.subr.mxu0 0.0
    %548 = vmatpush1.msra.mxu0 0.0
    %549 = vmatprep.subr.mxu0 0.0
    %550 = vmatpush1.msra.mxu0 0.0
    %551 = vmatprep.subr.mxu0 0.0
    %552 = vmatpush1.msra.mxu0 0.0
    %553 = vmatprep.subr.mxu0 0.0
    %554 = vmatpush1.msra.mxu0 0.0
    %555 = vmatprep.subr.mxu0 0.0
    %556 = vmatpush1.msra.mxu0 0.0
    %557 = vmatprep.subr.mxu0 0.0
    %558 = vmatpush1.msra.mxu0 0.0
    %559 = vmatprep.subr.mxu0 0.0
    %560 = vmatpush1.msra.mxu0 0.0
    %561 = vmatprep.subr.mxu0 0.0
    %562 = vmatpush1.msra.mxu0 0.0
    %563 = vmatprep.subr.mxu0 0.0
    %564 = vmatpush1.msra.mxu0 0.0
    %565 = vmatprep.subr.mxu0 0.0
    %566 = vmatpush1.msra.mxu0 0.0
    %567 = vmatprep.subr.mxu0 0.0
    %568 = vmatpush1.msra.mxu0 0.0
    %569 = vmatprep.subr.mxu0 0.0
    %570 = vmatpush1.msra.mxu0 0.0
    %571 = vmatprep.subr.mxu0 0.0
    %572 = vmatpush1.msra.mxu0 0.0
    %573 = vmatprep.subr.mxu0 0.0
    %574 = vmatpush1.msra.mxu0 0.0
    %575 = vmatprep.subr.mxu0 0.0
    %576 = vmatpush1.msra.mxu0 0.0
    %577 = vmatprep.subr.mxu0 0.0
    %578 = vmatpush1.msra.mxu0 0.0
    %579 = vmatprep.subr.mxu0 0.0
    %580 = vmatpush1.msra.mxu0 0.0
    %581 = vmatprep.subr.mxu0 0.0
    %582 = vmatpush1.msra.mxu0 0.0
    %583 = vmatprep.subr.mxu0 0.0
    %584 = vmatpush1.msra.mxu0 0.0
    %585 = vmatprep.subr.mxu0 0.0
    %586 = vmatpush1.msra.mxu0 0.0
    %587 = vmatprep.subr.mxu0 0.0
    %588 = vmatpush1.msra.mxu0 0.0
    %589 = vmatprep.subr.mxu0 0.0
    %590 = vmatpush1.msra.mxu0 0.0
    %591 = vmatprep.subr.mxu0 0.0
    %592 = vmatpush1.msra.mxu0 0.0
    %593 = vmatprep.subr.mxu0 0.0
    %594 = vmatpush1.msra.mxu0 0.0
    %595 = vmatprep.subr.mxu0 0.0
    %596 = vmatpush1.msra.mxu0 0.0
    %597 = vmatprep.subr.mxu0 0.0
    %598 = vmatpush1.msra.mxu0 0.0
    %599 = vmatprep.subr.mxu0 0.0
    %600 = vmatpush1.msra.mxu0 0.0
    %601 = vmatprep.subr.mxu0 0.0
    %602 = vmatpush1.msra.mxu0 0.0
    %603 = vmatprep.subr.mxu0 0.0
    %604 = vmatpush1.msra.mxu0 0.0
    %605 = vmatprep.subr.mxu0 0.0
    %606 = vmatpush1.msra.mxu0 0.0
    %607 = vmatprep.mubr.f32.mxu0 0.0
    %608 = vmatmul.mubr.f32.gmra.mrb[0].mxu0 %v538
    %v609 = vpop.f32.mrb[0].mxu0
    %v610 = vadd.f32 0.0, %v609
    %v611 = vpop.f32.mrb[0].mxu0
    %612 = vmatprep.mubr.f32.mxu0 0.0
    %613 = vmatmul.mubr.f32.gmra.mrb[0].mxu0 %v541
    %v614 = vpop.f32.mrb[0].mxu0
    %v615 = vadd.f32 0.0, %v614
    %v616 = vpop.f32.mrb[0].mxu0
    %617 = vdwg.mxu0
    %v618 = vmul.f32 %v527, %v527
    %v619 = vmul.f32 %v532, %v532
    %v620 = vld [vmem:[%s5] sm:$0xff]
    %v621 = vld [vmem:[%s5 + $0x8] sm:$0xff]
    %v622 = vld [vmem:[%s5 + $0x10] sm:$0xff]
    %v623 = vld [vmem:[%s5 + $0x18] sm:$0xff]
    %v624 = vld [vmem:[%s5 + $0x20] sm:$0xff]
    %v625 = vld [vmem:[%s5 + $0x28] sm:$0xff]
    %v626 = vld [vmem:[%s5 + $0x30] sm:$0xff]
    %v627 = vld [vmem:[%s5 + $0x38] sm:$0xff]
    %v628 = vld [vmem:[%s5 + $0x40] sm:$0xff]
    %v629 = vld [vmem:[%s5 + $0x48] sm:$0xff]
    %v630 = vld [vmem:[%s5 + $0x50] sm:$0xff]
    %v631 = vld [vmem:[%s5 + $0x58] sm:$0xff]
    %v632 = vlaneseq
    %v633 = vshrl.u32 %v632, 7
    %v634 = vsub.s32 0, %v633
    %v635 = vrot.slane %v44, %v634
    %vm636 = vcmask 785408
    %v638 = vsel %vm636, %v618, 0
    %v641 = vsel %vm636, %v619, 0
    %643 = vmatprep.subr.mxu0 0.0
    %644 = vmatpush1.msra.mxu0 %v620
    %645 = vmatprep.subr.mxu0 0.0
    %646 = vmatpush1.msra.mxu0 %v621
    %647 = vmatprep.subr.mxu0 0.0
    %648 = vmatpush1.msra.mxu0 %v622
    %649 = vmatprep.subr.mxu0 0.0
    %650 = vmatpush1.msra.mxu0 %v623
    %651 = vmatprep.subr.mxu0 0.0
    %652 = vmatpush1.msra.mxu0 %v624
    %653 = vmatprep.subr.mxu0 0.0
    %654 = vmatpush1.msra.mxu0 %v625
    %655 = vmatprep.subr.mxu0 0.0
    %656 = vmatpush1.msra.mxu0 %v626
    %657 = vmatprep.subr.mxu0 0.0
    %658 = vmatpush1.msra.mxu0 %v627
    %659 = vmatprep.subr.mxu0 0.0
    %660 = vmatpush1.msra.mxu0 %v628
    %661 = vmatprep.subr.mxu0 0.0
    %662 = vmatpush1.msra.mxu0 %v629
    %663 = vmatprep.subr.mxu0 0.0
    %664 = vmatpush1.msra.mxu0 %v630
    %665 = vmatprep.subr.mxu0 0.0
    %666 = vmatpush1.msra.mxu0 %v631
    %667 = vmatprep.subr.mxu0 0.0
    %668 = vmatpush1.msra.mxu0 0.0
    %669 = vmatprep.subr.mxu0 0.0
    %670 = vmatpush1.msra.mxu0 0.0
    %671 = vmatprep.subr.mxu0 0.0
    %672 = vmatpush1.msra.mxu0 0.0
    %673 = vmatprep.subr.mxu0 0.0
    %674 = vmatpush1.msra.mxu0 0.0
    %675 = vmatprep.subr.mxu0 0.0
    %676 = vmatpush1.msra.mxu0 0.0
    %677 = vmatprep.subr.mxu0 0.0
    %678 = vmatpush1.msra.mxu0 0.0
    %679 = vmatprep.subr.mxu0 0.0
    %680 = vmatpush1.msra.mxu0 0.0
    %681 = vmatprep.subr.mxu0 0.0
    %682 = vmatpush1.msra.mxu0 0.0
    %683 = vmatprep.subr.mxu0 0.0
    %684 = vmatpush1.msra.mxu0 0.0
    %685 = vmatprep.subr.mxu0 0.0
    %686 = vmatpush1.msra.mxu0 0.0
    %687 = vmatprep.subr.mxu0 0.0
    %688 = vmatpush1.msra.mxu0 0.0
    %689 = vmatprep.subr.mxu0 0.0
    %690 = vmatpush1.msra.mxu0 0.0
    %691 = vmatprep.subr.mxu0 0.0
    %692 = vmatpush1.msra.mxu0 0.0
    %693 = vmatprep.subr.mxu0 0.0
    %694 = vmatpush1.msra.mxu0 0.0
    %695 = vmatprep.subr.mxu0 0.0
    %696 = vmatpush1.msra.mxu0 0.0
    %697 = vmatprep.subr.mxu0 0.0
    %698 = vmatpush1.msra.mxu0 0.0
    %699 = vmatprep.subr.mxu0 0.0
    %700 = vmatpush1.msra.mxu0 0.0
    %701 = vmatprep.subr.mxu0 0.0
    %702 = vmatpush1.msra.mxu0 0.0
    %703 = vmatprep.subr.mxu0 0.0
    %704 = vmatpush1.msra.mxu0 0.0
    %705 = vmatprep.subr.mxu0 0.0
    %706 = vmatpush1.msra.mxu0 0.0
    %707 = vmatprep.mubr.f32.mxu0 0.0
    %708 = vmatmul.mubr.f32.gmra.mrb[0].mxu0 %v638
    %v709 = vpop.f32.mrb[0].mxu0
    %v710 = vadd.f32 %v635, %v709
    %v711 = vpop.f32.mrb[0].mxu0
    %712 = vmatprep.mubr.f32.mxu0 0.0
    %713 = vmatmul.mubr.f32.gmra.mrb[0].mxu0 %v641
    %v714 = vpop.f32.mrb[0].mxu0
    %v715 = vadd.f32 %v635, %v714
    %v716 = vpop.f32.mrb[0].mxu0
    %717 = vdwg.mxu0
    %v718 = vmax.f32 %v710, 0.0
    %v719 = vmax.f32 %v715, 0.0
    %v720 = vmul.f32 %v610, %v610
    %v721 = vmul.f32 %v615, %v615
    %v722 = vld [vmem:[%s6] sm:$0xff]
    %v723 = vld [vmem:[%s6 + $0x8] sm:$0xff]
    %v724 = vld [vmem:[%s6 + $0x10] sm:$0xff]
    %v725 = vld [vmem:[%s6 + $0x18] sm:$0xff]
    %v726 = vld [vmem:[%s6 + $0x20] sm:$0xff]
    %v727 = vld [vmem:[%s6 + $0x28] sm:$0xff]
    %v728 = vld [vmem:[%s6 + $0x30] sm:$0xff]
    %v729 = vld [vmem:[%s6 + $0x38] sm:$0xff]
    %v730 = vld [vmem:[%s6 + $0x40] sm:$0xff]
    %v731 = vld [vmem:[%s6 + $0x48] sm:$0xff]
    %v732 = vld [vmem:[%s6 + $0x50] sm:$0xff]
    %v733 = vld [vmem:[%s6 + $0x58] sm:$0xff]
    %v734 = vlaneseq
    %v735 = vshrl.u32 %v734, 7
    %v736 = vsub.s32 0, %v735
    %v737 = vrot.slane %v45, %v736
    %v739 = vsel %vm636, %v720, 0
    %v742 = vsel %vm636, %v721, 0
    %744 = vmatprep.subr.mxu0 0.0
    %745 = vmatpush1.msra.mxu0 %v722
    %746 = vmatprep.subr.mxu0 0.0
    %747 = vmatpush1.msra.mxu0 %v723
    %748 = vmatprep.subr.mxu0 0.0
    %749 = vmatpush1.msra.mxu0 %v724
    %750 = vmatprep.subr.mxu0 0.0
    %751 = vmatpush1.msra.mxu0 %v725
    %752 = vmatprep.subr.mxu0 0.0
    %753 = vmatpush1.msra.mxu0 %v726
    %754 = vmatprep.subr.mxu0 0.0
    %755 = vmatpush1.msra.mxu0 %v727
    %756 = vmatprep.subr.mxu0 0.0
    %757 = vmatpush1.msra.mxu0 %v728
    %758 = vmatprep.subr.mxu0 0.0
    %759 = vmatpush1.msra.mxu0 %v729
    %760 = vmatprep.subr.mxu0 0.0
    %761 = vmatpush1.msra.mxu0 %v730
    %762 = vmatprep.subr.mxu0 0.0
    %763 = vmatpush1.msra.mxu0 %v731
    %764 = vmatprep.subr.mxu0 0.0
    %765 = vmatpush1.msra.mxu0 %v732
    %766 = vmatprep.subr.mxu0 0.0
    %767 = vmatpush1.msra.mxu0 %v733
    %768 = vmatprep.subr.mxu0 0.0
    %769 = vmatpush1.msra.mxu0 0.0
    %770 = vmatprep.subr.mxu0 0.0
    %771 = vmatpush1.msra.mxu0 0.0
    %772 = vmatprep.subr.mxu0 0.0
    %773 = vmatpush1.msra.mxu0 0.0
    %774 = vmatprep.subr.mxu0 0.0
    %775 = vmatpush1.msra.mxu0 0.0
    %776 = vmatprep.subr.mxu0 0.0
    %777 = vmatpush1.msra.mxu0 0.0
    %778 = vmatprep.subr.mxu0 0.0
    %779 = vmatpush1.msra.mxu0 0.0
    %780 = vmatprep.subr.mxu0 0.0
    %781 = vmatpush1.msra.mxu0 0.0
    %782 = vmatprep.subr.mxu0 0.0
    %783 = vmatpush1.msra.mxu0 0.0
    %784 = vmatprep.subr.mxu0 0.0
    %785 = vmatpush1.msra.mxu0 0.0
    %786 = vmatprep.subr.mxu0 0.0
    %787 = vmatpush1.msra.mxu0 0.0
    %788 = vmatprep.subr.mxu0 0.0
    %789 = vmatpush1.msra.mxu0 0.0
    %790 = vmatprep.subr.mxu0 0.0
    %791 = vmatpush1.msra.mxu0 0.0
    %792 = vmatprep.subr.mxu0 0.0
    %793 = vmatpush1.msra.mxu0 0.0
    %794 = vmatprep.subr.mxu0 0.0
    %795 = vmatpush1.msra.mxu0 0.0
    %796 = vmatprep.subr.mxu0 0.0
    %797 = vmatpush1.msra.mxu0 0.0
    %798 = vmatprep.subr.mxu0 0.0
    %799 = vmatpush1.msra.mxu0 0.0
    %800 = vmatprep.subr.mxu0 0.0
    %801 = vmatpush1.msra.mxu0 0.0
    %802 = vmatprep.subr.mxu0 0.0
    %803 = vmatpush1.msra.mxu0 0.0
    %804 = vmatprep.subr.mxu0 0.0
    %805 = vmatpush1.msra.mxu0 0.0
    %806 = vmatprep.subr.mxu0 0.0
    %807 = vmatpush1.msra.mxu0 0.0
    %808 = vmatprep.mubr.f32.mxu0 0.0
    %809 = vmatmul.mubr.f32.gmra.mrb[0].mxu0 %v739
    %v810 = vpop.f32.mrb[0].mxu0
    %v811 = vadd.f32 %v737, %v810
    %v812 = vpop.f32.mrb[0].mxu0
    %813 = vmatprep.mubr.f32.mxu0 0.0
    %814 = vmatmul.mubr.f32.gmra.mrb[0].mxu0 %v742
    %v815 = vpop.f32.mrb[0].mxu0
    %v816 = vadd.f32 %v737, %v815
    %v817 = vpop.f32.mrb[0].mxu0
    %818 = vdwg.mxu0
    %v819 = vmax.f32 %v811, 0.0
    %v820 = vmax.f32 %v816, 0.0
    %v821 = vpack.c.bf16 %v719, %v718
    %v822 = vld [vmem:[%s7] sm:$0xf]
    %v823 = vld [vmem:[%s7 + $0x4] sm:$0xf]
    %v824 = vld [vmem:[%s7 + $0x8] sm:$0xf]
    %v825 = vld [vmem:[%s7 + $0xc] sm:$0xf]
    %v826 = vld [vmem:[%s7 + $0x10] sm:$0xf]
    %v827 = vld [vmem:[%s7 + $0x14] sm:$0xf]
    %v828 = vld [vmem:[%s7 + $0x18] sm:$0xf]
    %v829 = vld [vmem:[%s7 + $0x1c] sm:$0xf]
    %v830 = vpack.c.bf16 %v820, %v819
    %v831 = vld [vmem:[%s7 + $0x20] sm:$0xf]
    %v832 = vld [vmem:[%s7 + $0x24] sm:$0xf]
    %v833 = vld [vmem:[%s7 + $0x28] sm:$0xf]
    %v834 = vld [vmem:[%s7 + $0x2c] sm:$0xf]
    %v835 = vld [vmem:[%s7 + $0x30] sm:$0xf]
    %v836 = vld [vmem:[%s7 + $0x34] sm:$0xf]
    %v837 = vld [vmem:[%s7 + $0x38] sm:$0xf]
    %v838 = vld [vmem:[%s7 + $0x3c] sm:$0xf]
    %v847 = vunpack.c.l.b16 %v831
    %v848 = vunpack.c.l.b16 %v832
    %v849 = vunpack.c.l.b16 %v833
    %v850 = vunpack.c.l.b16 %v834
    %v851 = vunpack.c.l.b16 %v835
    %v852 = vunpack.c.l.b16 %v836
    %v853 = vunpack.c.l.b16 %v837
    %v854 = vunpack.c.l.b16 %v838
    %v855 = vpack.c.b16 %v848, %v847
    %v856 = vpack.c.b16 %v850, %v849
    %v857 = vpack.c.b16 %v852, %v851
    %v858 = vpack.c.b16 %v854, %v853
    %vm863 = vcmask 523264
    %v865 = vsel %vm863, %v830, 0
    %867 = vmatprep.subr.bf16.mxu0 0
    %868 = vmatpush1.bf16.msra.mxu0 %v855
    %869 = vmatprep.subr.bf16.mxu0 0
    %870 = vmatpush1.bf16.msra.mxu0 %v856
    %871 = vmatprep.subr.bf16.mxu0 0
    %872 = vmatpush1.bf16.msra.mxu0 %v857
    %873 = vmatprep.subr.bf16.mxu0 0
    %874 = vmatpush1.bf16.msra.mxu0 %v858
    %875 = vmatprep.subr.bf16.mxu0 0
    %876 = vmatpush1.bf16.msra.mxu0 0
    %877 = vmatprep.subr.bf16.mxu0 0
    %878 = vmatpush1.bf16.msra.mxu0 0
    %879 = vmatprep.subr.bf16.mxu0 0
    %880 = vmatpush1.bf16.msra.mxu0 0
    %881 = vmatprep.subr.bf16.mxu0 0
    %882 = vmatpush1.bf16.msra.mxu0 0
    %883 = vmatprep.subr.bf16.mxu0 0
    %884 = vmatpush1.bf16.msra.mxu0 0
    %885 = vmatprep.subr.bf16.mxu0 0
    %886 = vmatpush1.bf16.msra.mxu0 0
    %887 = vmatprep.subr.bf16.mxu0 0
    %888 = vmatpush1.bf16.msra.mxu0 0
    %889 = vmatprep.subr.bf16.mxu0 0
    %890 = vmatpush1.bf16.msra.mxu0 0
    %891 = vmatprep.subr.bf16.mxu0 0
    %892 = vmatpush1.bf16.msra.mxu0 0
    %893 = vmatprep.subr.bf16.mxu0 0
    %894 = vmatpush1.bf16.msra.mxu0 0
    %895 = vmatprep.subr.bf16.mxu0 0
    %896 = vmatpush1.bf16.msra.mxu0 0
    %897 = vmatprep.subr.bf16.mxu0 0
    %898 = vmatpush1.bf16.msra.mxu0 0
    %899 = vmatprep.mubr.bf16.mxu0 0
    %900 = vmatmul.mubr.bf16.gmra.mrb[0].mxu0 %v865
    %v901 = vpop.f32.mrb[0].mxu0
    %v902 = vadd.f32 0.0, %v901
    %v903 = vpop.f32.mrb[0].mxu0
    %v904 = vpop.f32.mrb[0].mxu0
    %v905 = vadd.f32 0.0, %v904
    %v906 = vpop.f32.mrb[0].mxu0
    %907 = vdwg.mxu0
    %v916 = vunpack.c.l.b16 %v822
    %v917 = vunpack.c.l.b16 %v823
    %v918 = vunpack.c.l.b16 %v824
    %v919 = vunpack.c.l.b16 %v825
    %v920 = vunpack.c.l.b16 %v826
    %v921 = vunpack.c.l.b16 %v827
    %v922 = vunpack.c.l.b16 %v828
    %v923 = vunpack.c.l.b16 %v829
    %v924 = vpack.c.b16 %v917, %v916
    %v925 = vpack.c.b16 %v919, %v918
    %v926 = vpack.c.b16 %v921, %v920
    %v927 = vpack.c.b16 %v923, %v922
    %v933 = vsel %vm863, %v821, 0
    %935 = vmatprep.subr.bf16.mxu0 0
    %936 = vmatpush1.bf16.msra.mxu0 %v924
    %937 = vmatprep.subr.bf16.mxu0 0
    %938 = vmatpush1.bf16.msra.mxu0 %v925
    %939 = vmatprep.subr.bf16.mxu0 0
    %940 = vmatpush1.bf16.msra.mxu0 %v926
    %941 = vmatprep.subr.bf16.mxu0 0
    %942 = vmatpush1.bf16.msra.mxu0 %v927
    %943 = vmatprep.subr.bf16.mxu0 0
    %944 = vmatpush1.bf16.msra.mxu0 0
    %945 = vmatprep.subr.bf16.mxu0 0
    %946 = vmatpush1.bf16.msra.mxu0 0
    %947 = vmatprep.subr.bf16.mxu0 0
    %948 = vmatpush1.bf16.msra.mxu0 0
    %949 = vmatprep.subr.bf16.mxu0 0
    %950 = vmatpush1.bf16.msra.mxu0 0
    %951 = vmatprep.subr.bf16.mxu0 0
    %952 = vmatpush1.bf16.msra.mxu0 0
    %953 = vmatprep.subr.bf16.mxu0 0
    %954 = vmatpush1.bf16.msra.mxu0 0
    %955 = vmatprep.subr.bf16.mxu0 0
    %956 = vmatpush1.bf16.msra.mxu0 0
    %957 = vmatprep.subr.bf16.mxu0 0
    %958 = vmatpush1.bf16.msra.mxu0 0
    %959 = vmatprep.subr.bf16.mxu0 0
    %960 = vmatpush1.bf16.msra.mxu0 0
    %961 = vmatprep.subr.bf16.mxu0 0
    %962 = vmatpush1.bf16.msra.mxu0 0
    %963 = vmatprep.subr.bf16.mxu0 0
    %964 = vmatpush1.bf16.msra.mxu0 0
    %965 = vmatprep.subr.bf16.mxu0 0
    %966 = vmatpush1.bf16.msra.mxu0 0
    %967 = vmatprep.mubr.bf16.mxu0 0
    %968 = vmatmul.mubr.bf16.gmra.mrb[0].mxu0 %v933
    %v969 = vpop.f32.mrb[0].mxu0
    %v970 = vadd.f32 %v902, %v969
    %v971 = vpop.f32.mrb[0].mxu0
    %v972 = vpop.f32.mrb[0].mxu0
    %v973 = vadd.f32 %v905, %v972
    %v974 = vpop.f32.mrb[0].mxu0
    %975 = vdwg.mxu0
    %v976 = vlaneseq
    %v977 = vshrl.u32 %v976, 7
    %v978 = vsub.s32 0, %v977
    %v979 = vrot.slane %v41, %v978
    %v980 = vadd.f32 %v970, %v979
    %v981 = vadd.f32 %v973, %v979
    %v982 = vmax.f32 %v980, 0.0
    %v983 = vmax.f32 %v981, 0.0
    %v984 = vpack.c.bf16 %v983, %v982
    %v985 = vld [vmem:[%s8] sm:$0xf]
    %v986 = vld [vmem:[%s8 + $0x4] sm:$0xf]
    %v987 = vld [vmem:[%s8 + $0x8] sm:$0xf]
    %v988 = vld [vmem:[%s8 + $0xc] sm:$0xf]
    %v989 = vld [vmem:[%s8 + $0x10] sm:$0xf]
    %v990 = vld [vmem:[%s8 + $0x14] sm:$0xf]
    %v991 = vld [vmem:[%s8 + $0x18] sm:$0xf]
    %v992 = vld [vmem:[%s8 + $0x1c] sm:$0xf]
    %v993 = vld [vmem:[%s8 + $0x20] sm:$0xf]
    %v994 = vld [vmem:[%s8 + $0x24] sm:$0xf]
    %v995 = vld [vmem:[%s8 + $0x28] sm:$0xf]
    %v996 = vld [vmem:[%s8 + $0x2c] sm:$0xf]
    %v997 = vld [vmem:[%s8 + $0x30] sm:$0xf]
    %v998 = vld [vmem:[%s8 + $0x34] sm:$0xf]
    %v999 = vld [vmem:[%s8 + $0x38] sm:$0xf]
    %v1000 = vld [vmem:[%s8 + $0x3c] sm:$0xf]
    %v1001 = vlaneseq
    %v1002 = vshrl.u32 %v1001, 7
    %v1003 = vsub.s32 0, %v1002
    %v1004 = vrot.slane %v46, %v1003
    %v1021 = vunpack.c.l.b16 %v985
    %v1022 = vunpack.c.l.b16 %v986
    %v1023 = vunpack.c.l.b16 %v987
    %v1024 = vunpack.c.l.b16 %v988
    %v1025 = vunpack.c.l.b16 %v989
    %v1026 = vunpack.c.l.b16 %v990
    %v1027 = vunpack.c.l.b16 %v991
    %v1028 = vunpack.c.l.b16 %v992
    %v1029 = vunpack.c.l.b16 %v993
    %v1030 = vunpack.c.l.b16 %v994
    %v1031 = vunpack.c.l.b16 %v995
    %v1032 = vunpack.c.l.b16 %v996
    %v1033 = vunpack.c.l.b16 %v997
    %v1034 = vunpack.c.l.b16 %v998
    %v1035 = vunpack.c.l.b16 %v999
    %v1036 = vunpack.c.l.b16 %v1000
    %v1037 = vpack.c.b16 %v1022, %v1021
    %v1038 = vpack.c.b16 %v1024, %v1023
    %v1039 = vpack.c.b16 %v1026, %v1025
    %v1040 = vpack.c.b16 %v1028, %v1027
    %v1041 = vpack.c.b16 %v1030, %v1029
    %v1042 = vpack.c.b16 %v1032, %v1031
    %v1043 = vpack.c.b16 %v1034, %v1033
    %v1044 = vpack.c.b16 %v1036, %v1035
    %1053 = vmatprep.subr.bf16.mxu0 0
    %1054 = vmatpush1.bf16.msra.mxu0 %v1037
    %1055 = vmatprep.subr.bf16.mxu0 0
    %1056 = vmatpush1.bf16.msra.mxu0 %v1038
    %1057 = vmatprep.subr.bf16.mxu0 0
    %1058 = vmatpush1.bf16.msra.mxu0 %v1039
    %1059 = vmatprep.subr.bf16.mxu0 0
    %1060 = vmatpush1.bf16.msra.mxu0 %v1040
    %1061 = vmatprep.subr.bf16.mxu0 0
    %1062 = vmatpush1.bf16.msra.mxu0 %v1041
    %1063 = vmatprep.subr.bf16.mxu0 0
    %1064 = vmatpush1.bf16.msra.mxu0 %v1042
    %1065 = vmatprep.subr.bf16.mxu0 0
    %1066 = vmatpush1.bf16.msra.mxu0 %v1043
    %1067 = vmatprep.subr.bf16.mxu0 0
    %1068 = vmatpush1.bf16.msra.mxu0 %v1044
    %1069 = vmatprep.subr.bf16.mxu0 0
    %1070 = vmatpush1.bf16.msra.mxu0 0
    %1071 = vmatprep.subr.bf16.mxu0 0
    %1072 = vmatpush1.bf16.msra.mxu0 0
    %1073 = vmatprep.subr.bf16.mxu0 0
    %1074 = vmatpush1.bf16.msra.mxu0 0
    %1075 = vmatprep.subr.bf16.mxu0 0
    %1076 = vmatpush1.bf16.msra.mxu0 0
    %1077 = vmatprep.subr.bf16.mxu0 0
    %1078 = vmatpush1.bf16.msra.mxu0 0
    %1079 = vmatprep.subr.bf16.mxu0 0
    %1080 = vmatpush1.bf16.msra.mxu0 0
    %1081 = vmatprep.subr.bf16.mxu0 0
    %1082 = vmatpush1.bf16.msra.mxu0 0
    %1083 = vmatprep.subr.bf16.mxu0 0
    %1084 = vmatpush1.bf16.msra.mxu0 0
    %1085 = vmatprep.mubr.bf16.mxu0 0
    %1086 = vmatmul.mubr.bf16.gmra.mrb[0].mxu0 %v984
    %v1087 = vpop.f32.mrb[0].mxu0
    %v1088 = vadd.f32 %v1004, %v1087
    %v1089 = vpop.f32.mrb[0].mxu0
    %v1090 = vpop.f32.mrb[0].mxu0
    %v1091 = vadd.f32 %v1004, %v1090
    %v1092 = vpop.f32.mrb[0].mxu0
    %1093 = vdwg.mxu0
    %v1094 = vmax.f32 %v1088, 0.0
    %v1095 = vmax.f32 %v1091, 0.0
    %v1096 = vld [vmem:[%s9] sm:$0xff]
    %v1098 = vsel %vm863, %v1096, 0
    %v1101 = vsel %vm863, %v1094, 0
    %v1104 = vsel %vm863, %v1095, 0
    %1106 = vmatprep.subr.mxu0 0.0
    %1107 = vmatpush1.xpose.msra.mxu0 %v1101
    %1108 = vmatprep.subr.mxu0 0.0
    %1109 = vmatpush1.xpose.msra.mxu0 %v1104
    %1110 = vmatprep.subr.mxu0 0.0
    %1111 = vmatpush1.xpose.msra.mxu0 0.0
    %1112 = vmatprep.subr.mxu0 0.0
    %1113 = vmatpush1.xpose.msra.mxu0 0.0
    %1114 = vmatprep.subr.mxu0 0.0
    %1115 = vmatpush1.xpose.msra.mxu0 0.0
    %1116 = vmatprep.subr.mxu0 0.0
    %1117 = vmatpush1.xpose.msra.mxu0 0.0
    %1118 = vmatprep.subr.mxu0 0.0
    %1119 = vmatpush1.xpose.msra.mxu0 0.0
    %1120 = vmatprep.subr.mxu0 0.0
    %1121 = vmatpush1.xpose.msra.mxu0 0.0
    %1122 = vmatprep.subr.mxu0 0.0
    %1123 = vmatpush1.xpose.msra.mxu0 0.0
    %1124 = vmatprep.subr.mxu0 0.0
    %1125 = vmatpush1.xpose.msra.mxu0 0.0
    %1126 = vmatprep.subr.mxu0 0.0
    %1127 = vmatpush1.xpose.msra.mxu0 0.0
    %1128 = vmatprep.subr.mxu0 0.0
    %1129 = vmatpush1.xpose.msra.mxu0 0.0
    %1130 = vmatprep.subr.mxu0 0.0
    %1131 = vmatpush1.xpose.msra.mxu0 0.0
    %1132 = vmatprep.subr.mxu0 0.0
    %1133 = vmatpush1.xpose.msra.mxu0 0.0
    %1134 = vmatprep.subr.mxu0 0.0
    %1135 = vmatpush1.xpose.msra.mxu0 0.0
    %1136 = vmatprep.subr.mxu0 0.0
    %1137 = vmatpush1.xpose.msra.mxu0 0.0
    %1138 = vmatprep.subr.mxu0 0.0
    %1139 = vmatpush1.xpose.msra.mxu0 0.0
    %1140 = vmatprep.subr.mxu0 0.0
    %1141 = vmatpush1.xpose.msra.mxu0 0.0
    %1142 = vmatprep.subr.mxu0 0.0
    %1143 = vmatpush1.xpose.msra.mxu0 0.0
    %1144 = vmatprep.subr.mxu0 0.0
    %1145 = vmatpush1.xpose.msra.mxu0 0.0
    %1146 = vmatprep.subr.mxu0 0.0
    %1147 = vmatpush1.xpose.msra.mxu0 0.0
    %1148 = vmatprep.subr.mxu0 0.0
    %1149 = vmatpush1.xpose.msra.mxu0 0.0
    %1150 = vmatprep.subr.mxu0 0.0
    %1151 = vmatpush1.xpose.msra.mxu0 0.0
    %1152 = vmatprep.subr.mxu0 0.0
    %1153 = vmatpush1.xpose.msra.mxu0 0.0
    %1154 = vmatprep.subr.mxu0 0.0
    %1155 = vmatpush1.xpose.msra.mxu0 0.0
    %1156 = vmatprep.subr.mxu0 0.0
    %1157 = vmatpush1.xpose.msra.mxu0 0.0
    %1158 = vmatprep.subr.mxu0 0.0
    %1159 = vmatpush1.xpose.msra.mxu0 0.0
    %1160 = vmatprep.subr.mxu0 0.0
    %1161 = vmatpush1.xpose.msra.mxu0 0.0
    %1162 = vmatprep.subr.mxu0 0.0
    %1163 = vmatpush1.xpose.msra.mxu0 0.0
    %1164 = vmatprep.subr.mxu0 0.0
    %1165 = vmatpush1.xpose.msra.mxu0 0.0
    %1166 = vmatprep.subr.mxu0 0.0
    %1167 = vmatpush1.xpose.msra.mxu0 0.0
    %1168 = vmatprep.subr.mxu0 0.0
    %1169 = vmatpush1.xpose.msra.mxu0 0.0
    %1170 = vmatprep.mubr.f32.mxu0 0.0
    %1171 = vmatmul.mubr.f32.gmra.mrb[0].mxu0 %v1098
    %v1172 = vpop.f32.mrb[0].mxu0
    %v1173 = vadd.f32 0.0, %v1172
    %v1174 = vpop.f32.mrb[0].mxu0
    %1175 = vdwg.mxu0
    %1177 = vset.pattern.permute.xlu0 0
    %1178 = vperm.xlu0 %1177, %v47
    %v1179 = vpop.permute.xlu0 %1178
    %v1181 = vadd.f32 %v1173, %v1179
    %v1182 = vtanh.pop %v1181
    %v1183 = vadd.f32 %v1182, 1.0
    %v1184 = vmul.f32 %v1183, 0.5
    %v1185 = vmul.f32 %v1184, 15.0
    %v1186 = vadd.f32 %v1185, 1.0
    %vm1187 = vcmask 122880
    %1188 = vst.msk [vmem:[#allocation2] sm:$0x1] %vm1187, %v1186
    // Predicated region
    $region46: #{tpu_custom_call.1} parent=1 // pred_check
      _
    $region47: #{tpu_custom_call.1} parent=1 // pred_check_branch
      %1190 = sbr.rel (0) target = $region49
    $region48: #{tpu_custom_call.1} parent=1 // pred_region
      %s1192 = ssub.s32 16, 16
      %1193 = vsyncadd [#allocation3], %s1192
      %s1195 = sshll.u32 [#allocation2], 4
      %s1196 = int_to_ptr.vmem [resolvable:$true] %s1195
      %1198 = dma.vmem_to_hbm [thread:$0]  %s1196, 16, %s11, [#allocation3]
    $region49: #{tpu_custom_call.1} parent=1 // pred_fallthru
      _
    // Predicated region
    $region50: #{tpu_custom_call.1} parent=1 // pred_check
      _
    $region51: #{tpu_custom_call.1} parent=1 // pred_check_branch
      %1200 = sbr.rel (0) target = $region53
    $region52: #{tpu_custom_call.1} parent=1 // pred_region
      %1201 = dma.done [#allocation3], 16
    $region53: #{tpu_custom_call.1} parent=1 // pred_fallthru
      _
    %1202 = vsyncpa [#allocation3], 1

// kernel: tpu_custom_call.1
$region0: #{tpu_custom_call.1}
  #allocation0 [shape = 'u32[]', space=smem, size = 0x4, offset = 0x4, fixed_abs, tag = 'smem constant byte address 0x4 - core index']
  #allocation1 [shape = 'u32[144,128]{1,0:T(1,128)}', space=vmem, size = 0x12000, scoped, tag = 'internal scratch']
  %s0 = inlined_call_operand.vmem [shape: bf16[16,256], index: 0, kind: input, shape index: {}]
  %s1 = inlined_call_operand.vmem [shape: bf16[256,128], index: 1, kind: input, shape index: {}]
  %s2 = inlined_call_operand.vmem [shape: f32[128,16], index: 2, kind: input, shape index: {}]
  %s3 = inlined_call_operand.vmem [shape: f32[128,16], index: 3, kind: input, shape index: {}]
  %s4 = inlined_call_operand.vmem [shape: f32[16,96], index: 4, kind: input, shape index: {}]
  %s5 = inlined_call_operand.vmem [shape: f32[96,64], index: 5, kind: input, shape index: {}]
  %s6 = inlined_call_operand.vmem [shape: f32[96,64], index: 6, kind: input, shape index: {}]
  %s7 = inlined_call_operand.vmem [shape: bf16[128,128], index: 7, kind: input, shape index: {}]
  %s8 = inlined_call_operand.vmem [shape: bf16[128,64], index: 8, kind: input, shape index: {}]
  %s9 = inlined_call_operand.vmem [shape: f32[8,64], index: 9, kind: input, shape index: {}]
  %s10 = inlined_call_operand.vmem [shape: f32[8,128], index: 10, kind: input, shape index: {}]
  %s11 = inlined_call_operand.hbm [shape: f32[1,16], index: 11, kind: output, shape index: {}]
  %s12 = sld [smem:[#allocation0]]
  $region54: #{tpu_custom_call.1} parent=0
    _
  %s14 = ssub.s32 1, %s12
  %s15 = scalar_select 0, %s14, %s12
  $region1: #{tpu_custom_call.1} parent=0
    #allocation2 [shape = 'u8[512]{0}', space=vmem, size = 0x400, scoped, tag = 'output window, operand 0, single buffered']
    #allocation3 [shape = 's32[1]{0}', space=sflag, size = 0x4, scoped, tag = 'scoped memory for tpu_custom_call.1']
    %16 = vsyncpa [#allocation3], 0
    // Predicated region
    $region2: #{tpu_custom_call.1} parent=1 // pred_check
      _
    $region3: #{tpu_custom_call.1} parent=1 // pred_check_branch
      %18 = sbr.rel (0) target = $region5
    $region4: #{tpu_custom_call.1} parent=1 // pred_region
      _
    $region5: #{tpu_custom_call.1} parent=1 // pred_fallthru
      _
    // Predicated region
    $region6: #{tpu_custom_call.1} parent=1 // pred_check
      _
    $region7: #{tpu_custom_call.1} parent=1 // pred_check_branch
      %20 = sbr.rel (0) target = $region9
    $region8: #{tpu_custom_call.1} parent=1 // pred_region
      _
    $region9: #{tpu_custom_call.1} parent=1 // pred_fallthru
      _
    // Predicated region
    $region10: #{tpu_custom_call.1} parent=1 // pred_check
      _
    $region11: #{tpu_custom_call.1} parent=1 // pred_check_branch
      %22 = sbr.rel (0) target = $region13
    $region12: #{tpu_custom_call.1} parent=1 // pred_region
      _
    $region13: #{tpu_custom_call.1} parent=1 // pred_fallthru
      _
    // Predicated region
    $region14: #{tpu_custom_call.1} parent=1 // pred_check
      _
    $region15: #{tpu_custom_call.1} parent=1 // pred_check_branch
      %24 = sbr.rel (0) target = $region17
    $region16: #{tpu_custom_call.1} parent=1 // pred_region
      _
    $region17: #{tpu_custom_call.1} parent=1 // pred_fallthru
      _
    // Predicated region
    $region18: #{tpu_custom_call.1} parent=1 // pred_check
      _
    $region19: #{tpu_custom_call.1} parent=1 // pred_check_branch
      %26 = sbr.rel (0) target = $region21
    $region20: #{tpu_custom_call.1} parent=1 // pred_region
      _
    $region21: #{tpu_custom_call.1} parent=1 // pred_fallthru
      _
    // Predicated region
    $region22: #{tpu_custom_call.1} parent=1 // pred_check
      _
    $region23: #{tpu_custom_call.1} parent=1 // pred_check_branch
      %28 = sbr.rel (0) target = $region25
    $region24: #{tpu_custom_call.1} parent=1 // pred_region
      _
    $region25: #{tpu_custom_call.1} parent=1 // pred_fallthru
      _
    // Predicated region
    $region26: #{tpu_custom_call.1} parent=1 // pred_check
      _
    $region27: #{tpu_custom_call.1} parent=1 // pred_check_branch
      %30 = sbr.rel (0) target = $region29
    $region28: #{tpu_custom_call.1} parent=1 // pred_region
      _
    $region29: #{tpu_custom_call.1} parent=1 // pred_fallthru
      _
    // Predicated region
    $region30: #{tpu_custom_call.1} parent=1 // pred_check
      _
    $region31: #{tpu_custom_call.1} parent=1 // pred_check_branch
      %32 = sbr.rel (0) target = $region33
    $region32: #{tpu_custom_call.1} parent=1 // pred_region
      _
    $region33: #{tpu_custom_call.1} parent=1 // pred_fallthru
      _
    // Predicated region
    $region34: #{tpu_custom_call.1} parent=1 // pred_check
      _
    $region35: #{tpu_custom_call.1} parent=1 // pred_check_branch
      %34 = sbr.rel (0) target = $region37
    $region36: #{tpu_custom_call.1} parent=1 // pred_region
      _
    $region37: #{tpu_custom_call.1} parent=1 // pred_fallthru
      _
    // Predicated region
    $region38: #{tpu_custom_call.1} parent=1 // pred_check
      _
    $region39: #{tpu_custom_call.1} parent=1 // pred_check_branch
      %36 = sbr.rel (0) target = $region41
    $region40: #{tpu_custom_call.1} parent=1 // pred_region
      _
    $region41: #{tpu_custom_call.1} parent=1 // pred_fallthru
      _
    // Predicated region
    $region42: #{tpu_custom_call.1} parent=1 // pred_check
      _
    $region43: #{tpu_custom_call.1} parent=1 // pred_check_branch
      %38 = sbr.rel (0) target = $region45
    $region44: #{tpu_custom_call.1} parent=1 // pred_region
      _
    $region45: #{tpu_custom_call.1} parent=1 // pred_fallthru
      _
    %v40 = vld [vmem:[%s10] sm:$0x1]
    %v41 = vld [vmem:[%s10 + $0x1] sm:$0x1]
    %v42 = vld [vmem:[%s10 + $0x2] sm:$0x1]
    %v43 = vld [vmem:[%s10 + $0x3] sm:$0x1]
    %v44 = vld [vmem:[%s10 + $0x4] sm:$0x1]
    %v45 = vld [vmem:[%s10 + $0x5] sm:$0x1]
    %v46 = vld [vmem:[%s10 + $0x6] sm:$0x1]
    %v47 = vld [vmem:[%s10 + $0x7] sm:$0x1]
    %v48 = vld [vmem:[%s0] sm:$0xff]
    %v49 = vld [vmem:[%s0 + $0x8] sm:$0xff]
    %v50 = vld [vmem:[%s1] sm:$0xf]
    %v51 = vld [vmem:[%s1 + $0x4] sm:$0xf]
    %v52 = vld [vmem:[%s1 + $0x8] sm:$0xf]
    %v53 = vld [vmem:[%s1 + $0xc] sm:$0xf]
    %v54 = vld [vmem:[%s1 + $0x10] sm:$0xf]
    %v55 = vld [vmem:[%s1 + $0x14] sm:$0xf]
    %v56 = vld [vmem:[%s1 + $0x18] sm:$0xf]
    %v57 = vld [vmem:[%s1 + $0x1c] sm:$0xf]
    %v58 = vld [vmem:[%s1 + $0x20] sm:$0xf]
    %v59 = vld [vmem:[%s1 + $0x24] sm:$0xf]
    %v60 = vld [vmem:[%s1 + $0x28] sm:$0xf]
    %v61 = vld [vmem:[%s1 + $0x2c] sm:$0xf]
    %v62 = vld [vmem:[%s1 + $0x30] sm:$0xf]
    %v63 = vld [vmem:[%s1 + $0x34] sm:$0xf]
    %v64 = vld [vmem:[%s1 + $0x38] sm:$0xf]
    %v65 = vld [vmem:[%s1 + $0x3c] sm:$0xf]
    %v66 = vld [vmem:[%s1 + $0x40] sm:$0xf]
    %v67 = vld [vmem:[%s1 + $0x44] sm:$0xf]
    %v68 = vld [vmem:[%s1 + $0x48] sm:$0xf]
    %v69 = vld [vmem:[%s1 + $0x4c] sm:$0xf]
    %v70 = vld [vmem:[%s1 + $0x50] sm:$0xf]
    %v71 = vld [vmem:[%s1 + $0x54] sm:$0xf]
    %v72 = vld [vmem:[%s1 + $0x58] sm:$0xf]
    %v73 = vld [vmem:[%s1 + $0x5c] sm:$0xf]
    %v74 = vld [vmem:[%s1 + $0x60] sm:$0xf]
    %v75 = vld [vmem:[%s1 + $0x64] sm:$0xf]
    %v76 = vld [vmem:[%s1 + $0x68] sm:$0xf]
    %v77 = vld [vmem:[%s1 + $0x6c] sm:$0xf]
    %v78 = vld [vmem:[%s1 + $0x70] sm:$0xf]
    %v79 = vld [vmem:[%s1 + $0x74] sm:$0xf]
    %v80 = vld [vmem:[%s1 + $0x78] sm:$0xf]
    %v81 = vld [vmem:[%s1 + $0x7c] sm:$0xf]
    %v82 = vlaneseq
    %v83 = vshrl.u32 %v82, 7
    %v84 = vsub.s32 0, %v83
    %v85 = vrot.slane %v40, %v84
    %v88 = vunpack.c.l.b16 %v48
    %v89 = vunpack.c.h.b16 %v48
    %v90 = vunpack.c.l.b16 %v49
    %v91 = vunpack.c.h.b16 %v49
    %v92 = vpack.c.b16 %v90, %v88
    %v93 = vpack.c.b16 %v91, %v89
    %v128 = vunpack.c.l.b16 %v50
    %v129 = vunpack.c.l.b16 %v51
    %v130 = vunpack.c.l.b16 %v52
    %v131 = vunpack.c.l.b16 %v53
    %v132 = vunpack.c.l.b16 %v54
    %v133 = vunpack.c.l.b16 %v55
    %v134 = vunpack.c.l.b16 %v56
    %v135 = vunpack.c.l.b16 %v57
    %v136 = vunpack.c.l.b16 %v58
    %v137 = vunpack.c.l.b16 %v59
    %v138 = vunpack.c.l.b16 %v60
    %v139 = vunpack.c.l.b16 %v61
    %v140 = vunpack.c.l.b16 %v62
    %v141 = vunpack.c.l.b16 %v63
    %v142 = vunpack.c.l.b16 %v64
    %v143 = vunpack.c.l.b16 %v65
    %v144 = vunpack.c.l.b16 %v66
    %v145 = vunpack.c.l.b16 %v67
    %v146 = vunpack.c.l.b16 %v68
    %v147 = vunpack.c.l.b16 %v69
    %v148 = vunpack.c.l.b16 %v70
    %v149 = vunpack.c.l.b16 %v71
    %v150 = vunpack.c.l.b16 %v72
    %v151 = vunpack.c.l.b16 %v73
    %v152 = vunpack.c.l.b16 %v74
    %v153 = vunpack.c.l.b16 %v75
    %v154 = vunpack.c.l.b16 %v76
    %v155 = vunpack.c.l.b16 %v77
    %v156 = vunpack.c.l.b16 %v78
    %v157 = vunpack.c.l.b16 %v79
    %v158 = vunpack.c.l.b16 %v80
    %v159 = vunpack.c.l.b16 %v81
    %v160 = vpack.c.b16 %v129, %v128
    %v161 = vpack.c.b16 %v131, %v130
    %v162 = vpack.c.b16 %v133, %v132
    %v163 = vpack.c.b16 %v135, %v134
    %v164 = vpack.c.b16 %v137, %v136
    %v165 = vpack.c.b16 %v139, %v138
    %v166 = vpack.c.b16 %v141, %v140
    %v167 = vpack.c.b16 %v143, %v142
    %v168 = vpack.c.b16 %v145, %v144
    %v169 = vpack.c.b16 %v147, %v146
    %v170 = vpack.c.b16 %v149, %v148
    %v171 = vpack.c.b16 %v151, %v150
    %v172 = vpack.c.b16 %v153, %v152
    %v173 = vpack.c.b16 %v155, %v154
    %v174 = vpack.c.b16 %v157, %v156
    %v175 = vpack.c.b16 %v159, %v158
    %192 = vmatprep.subr.bf16.mxu0 0
    %193 = vmatpush1.bf16.msra.mxu0 %v160
    %194 = vmatprep.subr.bf16.mxu0 0
    %195 = vmatpush1.bf16.msra.mxu0 %v161
    %196 = vmatprep.subr.bf16.mxu0 0
    %197 = vmatpush1.bf16.msra.mxu0 %v162
    %198 = vmatprep.subr.bf16.mxu0 0
    %199 = vmatpush1.bf16.msra.mxu0 %v163
    %200 = vmatprep.subr.bf16.mxu0 0
    %201 = vmatpush1.bf16.msra.mxu0 %v164
    %202 = vmatprep.subr.bf16.mxu0 0
    %203 = vmatpush1.bf16.msra.mxu0 %v165
    %204 = vmatprep.subr.bf16.mxu0 0
    %205 = vmatpush1.bf16.msra.mxu0 %v166
    %206 = vmatprep.subr.bf16.mxu0 0
    %207 = vmatpush1.bf16.msra.mxu0 %v167
    %208 = vmatprep.subr.bf16.mxu0 0
    %209 = vmatpush1.bf16.msra.mxu0 %v168
    %210 = vmatprep.subr.bf16.mxu0 0
    %211 = vmatpush1.bf16.msra.mxu0 %v169
    %212 = vmatprep.subr.bf16.mxu0 0
    %213 = vmatpush1.bf16.msra.mxu0 %v170
    %214 = vmatprep.subr.bf16.mxu0 0
    %215 = vmatpush1.bf16.msra.mxu0 %v171
    %216 = vmatprep.subr.bf16.mxu0 0
    %217 = vmatpush1.bf16.msra.mxu0 %v172
    %218 = vmatprep.subr.bf16.mxu0 0
    %219 = vmatpush1.bf16.msra.mxu0 %v173
    %220 = vmatprep.subr.bf16.mxu0 0
    %221 = vmatpush1.bf16.msra.mxu0 %v174
    %222 = vmatprep.subr.bf16.mxu0 0
    %223 = vmatpush1.bf16.msra.mxu0 %v175
    %224 = vmatprep.mubr.bf16.mxu0 %v93
    %225 = vmatmul.mubr.bf16.gmra.mrb[0].mxu0 %v92
    %v226 = vpop.f32.mrb[0].mxu0
    %v227 = vadd.f32 %v85, %v226
    %v228 = vpop.f32.mrb[0].mxu0
    %v229 = vpop.f32.mrb[0].mxu0
    %v230 = vadd.f32 %v85, %v229
    %v231 = vpop.f32.mrb[0].mxu0
    %232 = vdwg.mxu0
    %v233 = vmax.f32 %v227, 0.0
    %v234 = vmax.f32 %v230, 0.0
    %v235 = vld [vmem:[%s2] sm:$0xff]
    %v236 = vld [vmem:[%s2 + $0x8] sm:$0xff]
    %v237 = vld [vmem:[%s2 + $0x10] sm:$0xff]
    %v238 = vld [vmem:[%s2 + $0x18] sm:$0xff]
    %v239 = vld [vmem:[%s2 + $0x20] sm:$0xff]
    %v240 = vld [vmem:[%s2 + $0x28] sm:$0xff]
    %v241 = vld [vmem:[%s2 + $0x30] sm:$0xff]
    %v242 = vld [vmem:[%s2 + $0x38] sm:$0xff]
    %v243 = vld [vmem:[%s2 + $0x40] sm:$0xff]
    %v244 = vld [vmem:[%s2 + $0x48] sm:$0xff]
    %v245 = vld [vmem:[%s2 + $0x50] sm:$0xff]
    %v246 = vld [vmem:[%s2 + $0x58] sm:$0xff]
    %v247 = vld [vmem:[%s2 + $0x60] sm:$0xff]
    %v248 = vld [vmem:[%s2 + $0x68] sm:$0xff]
    %v249 = vld [vmem:[%s2 + $0x70] sm:$0xff]
    %v250 = vld [vmem:[%s2 + $0x78] sm:$0xff]
    %v251 = vlaneseq
    %v252 = vshrl.u32 %v251, 7
    %v253 = vsub.s32 0, %v252
    %v254 = vrot.slane %v42, %v253
    %255 = vmatprep.subr.mxu0 0.0
    %256 = vmatpush1.msra.mxu0 %v235
    %257 = vmatprep.subr.mxu0 0.0
    %258 = vmatpush1.msra.mxu0 %v236
    %259 = vmatprep.subr.mxu0 0.0
    %260 = vmatpush1.msra.mxu0 %v237
    %261 = vmatprep.subr.mxu0 0.0
    %262 = vmatpush1.msra.mxu0 %v238
    %263 = vmatprep.subr.mxu0 0.0
    %264 = vmatpush1.msra.mxu0 %v239
    %265 = vmatprep.subr.mxu0 0.0
    %266 = vmatpush1.msra.mxu0 %v240
    %267 = vmatprep.subr.mxu0 0.0
    %268 = vmatpush1.msra.mxu0 %v241
    %269 = vmatprep.subr.mxu0 0.0
    %270 = vmatpush1.msra.mxu0 %v242
    %271 = vmatprep.subr.mxu0 0.0
    %272 = vmatpush1.msra.mxu0 %v243
    %273 = vmatprep.subr.mxu0 0.0
    %274 = vmatpush1.msra.mxu0 %v244
    %275 = vmatprep.subr.mxu0 0.0
    %276 = vmatpush1.msra.mxu0 %v245
    %277 = vmatprep.subr.mxu0 0.0
    %278 = vmatpush1.msra.mxu0 %v246
    %279 = vmatprep.subr.mxu0 0.0
    %280 = vmatpush1.msra.mxu0 %v247
    %281 = vmatprep.subr.mxu0 0.0
    %282 = vmatpush1.msra.mxu0 %v248
    %283 = vmatprep.subr.mxu0 0.0
    %284 = vmatpush1.msra.mxu0 %v249
    %285 = vmatprep.subr.mxu0 0.0
    %286 = vmatpush1.msra.mxu0 %v250
    %287 = vmatprep.subr.mxu0 0.0
    %288 = vmatpush1.msra.mxu0 0.0
    %289 = vmatprep.subr.mxu0 0.0
    %290 = vmatpush1.msra.mxu0 0.0
    %291 = vmatprep.subr.mxu0 0.0
    %292 = vmatpush1.msra.mxu0 0.0
    %293 = vmatprep.subr.mxu0 0.0
    %294 = vmatpush1.msra.mxu0 0.0
    %295 = vmatprep.subr.mxu0 0.0
    %296 = vmatpush1.msra.mxu0 0.0
    %297 = vmatprep.subr.mxu0 0.0
    %298 = vmatpush1.msra.mxu0 0.0
    %299 = vmatprep.subr.mxu0 0.0
    %300 = vmatpush1.msra.mxu0 0.0
    %301 = vmatprep.subr.mxu0 0.0
    %302 = vmatpush1.msra.mxu0 0.0
    %303 = vmatprep.subr.mxu0 0.0
    %304 = vmatpush1.msra.mxu0 0.0
    %305 = vmatprep.subr.mxu0 0.0
    %306 = vmatpush1.msra.mxu0 0.0
    %307 = vmatprep.subr.mxu0 0.0
    %308 = vmatpush1.msra.mxu0 0.0
    %309 = vmatprep.subr.mxu0 0.0
    %310 = vmatpush1.msra.mxu0 0.0
    %311 = vmatprep.subr.mxu0 0.0
    %312 = vmatpush1.msra.mxu0 0.0
    %313 = vmatprep.subr.mxu0 0.0
    %314 = vmatpush1.msra.mxu0 0.0
    %315 = vmatprep.subr.mxu0 0.0
    %316 = vmatpush1.msra.mxu0 0.0
    %317 = vmatprep.subr.mxu0 0.0
    %318 = vmatpush1.msra.mxu0 0.0
    %319 = vmatprep.mubr.f32.mxu0 0.0
    %320 = vmatmul.mubr.f32.gmra.mrb[0].mxu0 %v233
    %v321 = vpop.f32.mrb[0].mxu0
    %v322 = vadd.f32 %v254, %v321
    %v323 = vpop.f32.mrb[0].mxu0
    %324 = vmatprep.mubr.f32.mxu0 0.0
    %325 = vmatmul.mubr.f32.gmra.mrb[0].mxu0 %v234
    %v326 = vpop.f32.mrb[0].mxu0
    %v327 = vadd.f32 %v254, %v326
    %v328 = vpop.f32.mrb[0].mxu0
    %329 = vdwg.mxu0
    %v330 = vld [vmem:[%s3] sm:$0xff]
    %v331 = vld [vmem:[%s3 + $0x8] sm:$0xff]
    %v332 = vld [vmem:[%s3 + $0x10] sm:$0xff]
    %v333 = vld [vmem:[%s3 + $0x18] sm:$0xff]
    %v334 = vld [vmem:[%s3 + $0x20] sm:$0xff]
    %v335 = vld [vmem:[%s3 + $0x28] sm:$0xff]
    %v336 = vld [vmem:[%s3 + $0x30] sm:$0xff]
    %v337 = vld [vmem:[%s3 + $0x38] sm:$0xff]
    %v338 = vld [vmem:[%s3 + $0x40] sm:$0xff]
    %v339 = vld [vmem:[%s3 + $0x48] sm:$0xff]
    %v340 = vld [vmem:[%s3 + $0x50] sm:$0xff]
    %v341 = vld [vmem:[%s3 + $0x58] sm:$0xff]
    %v342 = vld [vmem:[%s3 + $0x60] sm:$0xff]
    %v343 = vld [vmem:[%s3 + $0x68] sm:$0xff]
    %v344 = vld [vmem:[%s3 + $0x70] sm:$0xff]
    %v345 = vld [vmem:[%s3 + $0x78] sm:$0xff]
    %v346 = vlaneseq
    %v347 = vshrl.u32 %v346, 7
    %v348 = vsub.s32 0, %v347
    %v349 = vrot.slane %v43, %v348
    %350 = vmatprep.subr.mxu0 0.0
    %351 = vmatpush1.msra.mxu0 %v330
    %352 = vmatprep.subr.mxu0 0.0
    %353 = vmatpush1.msra.mxu0 %v331
    %354 = vmatprep.subr.mxu0 0.0
    %355 = vmatpush1.msra.mxu0 %v332
    %356 = vmatprep.subr.mxu0 0.0
    %357 = vmatpush1.msra.mxu0 %v333
    %358 = vmatprep.subr.mxu0 0.0
    %359 = vmatpush1.msra.mxu0 %v334
    %360 = vmatprep.subr.mxu0 0.0
    %361 = vmatpush1.msra.mxu0 %v335
    %362 = vmatprep.subr.mxu0 0.0
    %363 = vmatpush1.msra.mxu0 %v336
    %364 = vmatprep.subr.mxu0 0.0
    %365 = vmatpush1.msra.mxu0 %v337
    %366 = vmatprep.subr.mxu0 0.0
    %367 = vmatpush1.msra.mxu0 %v338
    %368 = vmatprep.subr.mxu0 0.0
    %369 = vmatpush1.msra.mxu0 %v339
    %370 = vmatprep.subr.mxu0 0.0
    %371 = vmatpush1.msra.mxu0 %v340
    %372 = vmatprep.subr.mxu0 0.0
    %373 = vmatpush1.msra.mxu0 %v341
    %374 = vmatprep.subr.mxu0 0.0
    %375 = vmatpush1.msra.mxu0 %v342
    %376 = vmatprep.subr.mxu0 0.0
    %377 = vmatpush1.msra.mxu0 %v343
    %378 = vmatprep.subr.mxu0 0.0
    %379 = vmatpush1.msra.mxu0 %v344
    %380 = vmatprep.subr.mxu0 0.0
    %381 = vmatpush1.msra.mxu0 %v345
    %382 = vmatprep.subr.mxu0 0.0
    %383 = vmatpush1.msra.mxu0 0.0
    %384 = vmatprep.subr.mxu0 0.0
    %385 = vmatpush1.msra.mxu0 0.0
    %386 = vmatprep.subr.mxu0 0.0
    %387 = vmatpush1.msra.mxu0 0.0
    %388 = vmatprep.subr.mxu0 0.0
    %389 = vmatpush1.msra.mxu0 0.0
    %390 = vmatprep.subr.mxu0 0.0
    %391 = vmatpush1.msra.mxu0 0.0
    %392 = vmatprep.subr.mxu0 0.0
    %393 = vmatpush1.msra.mxu0 0.0
    %394 = vmatprep.subr.mxu0 0.0
    %395 = vmatpush1.msra.mxu0 0.0
    %396 = vmatprep.subr.mxu0 0.0
    %397 = vmatpush1.msra.mxu0 0.0
    %398 = vmatprep.subr.mxu0 0.0
    %399 = vmatpush1.msra.mxu0 0.0
    %400 = vmatprep.subr.mxu0 0.0
    %401 = vmatpush1.msra.mxu0 0.0
    %402 = vmatprep.subr.mxu0 0.0
    %403 = vmatpush1.msra.mxu0 0.0
    %404 = vmatprep.subr.mxu0 0.0
    %405 = vmatpush1.msra.mxu0 0.0
    %406 = vmatprep.subr.mxu0 0.0
    %407 = vmatpush1.msra.mxu0 0.0
    %408 = vmatprep.subr.mxu0 0.0
    %409 = vmatpush1.msra.mxu0 0.0
    %410 = vmatprep.subr.mxu0 0.0
    %411 = vmatpush1.msra.mxu0 0.0
    %412 = vmatprep.subr.mxu0 0.0
    %413 = vmatpush1.msra.mxu0 0.0
    %414 = vmatprep.mubr.f32.mxu0 0.0
    %415 = vmatmul.mubr.f32.gmra.mrb[0].mxu0 %v233
    %v416 = vpop.f32.mrb[0].mxu0
    %v417 = vadd.f32 %v349, %v416
    %v418 = vpop.f32.mrb[0].mxu0
    %419 = vmatprep.mubr.f32.mxu0 0.0
    %420 = vmatmul.mubr.f32.gmra.mrb[0].mxu0 %v234
    %v421 = vpop.f32.mrb[0].mxu0
    %v422 = vadd.f32 %v349, %v421
    %v423 = vpop.f32.mrb[0].mxu0
    %424 = vdwg.mxu0
    %v425 = vmul.f32 %v322, %v322
    %v426 = vmul.f32 %v327, %v327
    %vm427 = vcmask 130048
    %v428 = vsel %vm427, %v425, 0.0
    %429 = vadd.xlane.f32.xlu0 %v428
    %v430 = vpop.xlane.xlu0 %429
    %v431 = vsel %vm427, %v426, 0.0
    %432 = vadd.xlane.f32.xlu0 %v431
    %v433 = vpop.xlane.xlu0 %432
    %v434 = vadd.f32 %v430, 1e-12
    %v435 = vadd.f32 %v433, 1e-12
    %v436 = vrsqrt.pop %v434
    %v437 = vrsqrt.pop %v435
    %v438 = vmul.f32 %v417, %v417
    %v439 = vmul.f32 %v422, %v422
    %v440 = vsel %vm427, %v438, 0.0
    %441 = vadd.xlane.f32.xlu0 %v440
    %v442 = vpop.xlane.xlu0 %441
    %v443 = vsel %vm427, %v439, 0.0
    %444 = vadd.xlane.f32.xlu0 %v443
    %v445 = vpop.xlane.xlu0 %444
    %v446 = vadd.f32 %v442, 1e-12
    %v447 = vadd.f32 %v445, 1e-12
    %v448 = vrsqrt.pop %v446
    %v449 = vrsqrt.pop %v447
    %v450 = vmul.f32 %v322, %v436
    %v451 = vmul.f32 %v327, %v437
    %v452 = vld [vmem:[%s4] sm:$0xff]
    %v453 = vld [vmem:[%s4 + $0x8] sm:$0xff]
    %v455 = vsel %vm427, %v450, 0
    %v458 = vsel %vm427, %v451, 0
    %460 = vmatprep.subr.mxu0 0.0
    %461 = vmatpush1.msra.mxu0 %v452
    %462 = vmatprep.subr.mxu0 0.0
    %463 = vmatpush1.msra.mxu0 %v453
    %464 = vmatprep.subr.mxu0 0.0
    %465 = vmatpush1.msra.mxu0 0.0
    %466 = vmatprep.subr.mxu0 0.0
    %467 = vmatpush1.msra.mxu0 0.0
    %468 = vmatprep.subr.mxu0 0.0
    %469 = vmatpush1.msra.mxu0 0.0
    %470 = vmatprep.subr.mxu0 0.0
    %471 = vmatpush1.msra.mxu0 0.0
    %472 = vmatprep.subr.mxu0 0.0
    %473 = vmatpush1.msra.mxu0 0.0
    %474 = vmatprep.subr.mxu0 0.0
    %475 = vmatpush1.msra.mxu0 0.0
    %476 = vmatprep.subr.mxu0 0.0
    %477 = vmatpush1.msra.mxu0 0.0
    %478 = vmatprep.subr.mxu0 0.0
    %479 = vmatpush1.msra.mxu0 0.0
    %480 = vmatprep.subr.mxu0 0.0
    %481 = vmatpush1.msra.mxu0 0.0
    %482 = vmatprep.subr.mxu0 0.0
    %483 = vmatpush1.msra.mxu0 0.0
    %484 = vmatprep.subr.mxu0 0.0
    %485 = vmatpush1.msra.mxu0 0.0
    %486 = vmatprep.subr.mxu0 0.0
    %487 = vmatpush1.msra.mxu0 0.0
    %488 = vmatprep.subr.mxu0 0.0
    %489 = vmatpush1.msra.mxu0 0.0
    %490 = vmatprep.subr.mxu0 0.0
    %491 = vmatpush1.msra.mxu0 0.0
    %492 = vmatprep.subr.mxu0 0.0
    %493 = vmatpush1.msra.mxu0 0.0
    %494 = vmatprep.subr.mxu0 0.0
    %495 = vmatpush1.msra.mxu0 0.0
    %496 = vmatprep.subr.mxu0 0.0
    %497 = vmatpush1.msra.mxu0 0.0
    %498 = vmatprep.subr.mxu0 0.0
    %499 = vmatpush1.msra.mxu0 0.0
    %500 = vmatprep.subr.mxu0 0.0
    %501 = vmatpush1.msra.mxu0 0.0
    %502 = vmatprep.subr.mxu0 0.0
    %503 = vmatpush1.msra.mxu0 0.0
    %504 = vmatprep.subr.mxu0 0.0
    %505 = vmatpush1.msra.mxu0 0.0
    %506 = vmatprep.subr.mxu0 0.0
    %507 = vmatpush1.msra.mxu0 0.0
    %508 = vmatprep.subr.mxu0 0.0
    %509 = vmatpush1.msra.mxu0 0.0
    %510 = vmatprep.subr.mxu0 0.0
    %511 = vmatpush1.msra.mxu0 0.0
    %512 = vmatprep.subr.mxu0 0.0
    %513 = vmatpush1.msra.mxu0 0.0
    %514 = vmatprep.subr.mxu0 0.0
    %515 = vmatpush1.msra.mxu0 0.0
    %516 = vmatprep.subr.mxu0 0.0
    %517 = vmatpush1.msra.mxu0 0.0
    %518 = vmatprep.subr.mxu0 0.0
    %519 = vmatpush1.msra.mxu0 0.0
    %520 = vmatprep.subr.mxu0 0.0
    %521 = vmatpush1.msra.mxu0 0.0
    %522 = vmatprep.subr.mxu0 0.0
    %523 = vmatpush1.msra.mxu0 0.0
    %524 = vmatprep.mubr.f32.mxu0 0.0
    %525 = vmatmul.mubr.f32.gmra.mrb[0].mxu0 %v455
    %v526 = vpop.f32.mrb[0].mxu0
    %v527 = vadd.f32 0.0, %v526
    %v528 = vpop.f32.mrb[0].mxu0
    %529 = vmatprep.mubr.f32.mxu0 0.0
    %530 = vmatmul.mubr.f32.gmra.mrb[0].mxu0 %v458
    %v531 = vpop.f32.mrb[0].mxu0
    %v532 = vadd.f32 0.0, %v531
    %v533 = vpop.f32.mrb[0].mxu0
    %534 = vdwg.mxu0
    %v535 = vmul.f32 %v417, %v448
    %v536 = vmul.f32 %v422, %v449
    %v538 = vsel %vm427, %v535, 0
    %v541 = vsel %vm427, %v536, 0
    %543 = vmatprep.subr.mxu0 0.0
    %544 = vmatpush1.msra.mxu0 %v452
    %545 = vmatprep.subr.mxu0 0.0
    %546 = vmatpush1.msra.mxu0 %v453
    %547 = vmatprep.subr.mxu0 0.0
    %548 = vmatpush1.msra.mxu0 0.0
    %549 = vmatprep.subr.mxu0 0.0
    %550 = vmatpush1.msra.mxu0 0.0
    %551 = vmatprep.subr.mxu0 0.0
    %552 = vmatpush1.msra.mxu0 0.0
    %553 = vmatprep.subr.mxu0 0.0
    %554 = vmatpush1.msra.mxu0 0.0
    %555 = vmatprep.subr.mxu0 0.0
    %556 = vmatpush1.msra.mxu0 0.0
    %557 = vmatprep.subr.mxu0 0.0
    %558 = vmatpush1.msra.mxu0 0.0
    %559 = vmatprep.subr.mxu0 0.0
    %560 = vmatpush1.msra.mxu0 0.0
    %561 = vmatprep.subr.mxu0 0.0
    %562 = vmatpush1.msra.mxu0 0.0
    %563 = vmatprep.subr.mxu0 0.0
    %564 = vmatpush1.msra.mxu0 0.0
    %565 = vmatprep.subr.mxu0 0.0
    %566 = vmatpush1.msra.mxu0 0.0
    %567 = vmatprep.subr.mxu0 0.0
    %568 = vmatpush1.msra.mxu0 0.0
    %569 = vmatprep.subr.mxu0 0.0
    %570 = vmatpush1.msra.mxu0 0.0
    %571 = vmatprep.subr.mxu0 0.0
    %572 = vmatpush1.msra.mxu0 0.0
    %573 = vmatprep.subr.mxu0 0.0
    %574 = vmatpush1.msra.mxu0 0.0
    %575 = vmatprep.subr.mxu0 0.0
    %576 = vmatpush1.msra.mxu0 0.0
    %577 = vmatprep.subr.mxu0 0.0
    %578 = vmatpush1.msra.mxu0 0.0
    %579 = vmatprep.subr.mxu0 0.0
    %580 = vmatpush1.msra.mxu0 0.0
    %581 = vmatprep.subr.mxu0 0.0
    %582 = vmatpush1.msra.mxu0 0.0
    %583 = vmatprep.subr.mxu0 0.0
    %584 = vmatpush1.msra.mxu0 0.0
    %585 = vmatprep.subr.mxu0 0.0
    %586 = vmatpush1.msra.mxu0 0.0
    %587 = vmatprep.subr.mxu0 0.0
    %588 = vmatpush1.msra.mxu0 0.0
    %589 = vmatprep.subr.mxu0 0.0
    %590 = vmatpush1.msra.mxu0 0.0
    %591 = vmatprep.subr.mxu0 0.0
    %592 = vmatpush1.msra.mxu0 0.0
    %593 = vmatprep.subr.mxu0 0.0
    %594 = vmatpush1.msra.mxu0 0.0
    %595 = vmatprep.subr.mxu0 0.0
    %596 = vmatpush1.msra.mxu0 0.0
    %597 = vmatprep.subr.mxu0 0.0
    %598 = vmatpush1.msra.mxu0 0.0
    %599 = vmatprep.subr.mxu0 0.0
    %600 = vmatpush1.msra.mxu0 0.0
    %601 = vmatprep.subr.mxu0 0.0
    %602 = vmatpush1.msra.mxu0 0.0
    %603 = vmatprep.subr.mxu0 0.0
    %604 = vmatpush1.msra.mxu0 0.0
    %605 = vmatprep.subr.mxu0 0.0
    %606 = vmatpush1.msra.mxu0 0.0
    %607 = vmatprep.mubr.f32.mxu0 0.0
    %608 = vmatmul.mubr.f32.gmra.mrb[0].mxu0 %v538
    %v609 = vpop.f32.mrb[0].mxu0
    %v610 = vadd.f32 0.0, %v609
    %v611 = vpop.f32.mrb[0].mxu0
    %612 = vmatprep.mubr.f32.mxu0 0.0
    %613 = vmatmul.mubr.f32.gmra.mrb[0].mxu0 %v541
    %v614 = vpop.f32.mrb[0].mxu0
    %v615 = vadd.f32 0.0, %v614
    %v616 = vpop.f32.mrb[0].mxu0
    %617 = vdwg.mxu0
    %v618 = vmul.f32 %v527, %v527
    %v619 = vmul.f32 %v532, %v532
    %v620 = vld [vmem:[%s5] sm:$0xff]
    %v621 = vld [vmem:[%s5 + $0x8] sm:$0xff]
    %v622 = vld [vmem:[%s5 + $0x10] sm:$0xff]
    %v623 = vld [vmem:[%s5 + $0x18] sm:$0xff]
    %v624 = vld [vmem:[%s5 + $0x20] sm:$0xff]
    %v625 = vld [vmem:[%s5 + $0x28] sm:$0xff]
    %v626 = vld [vmem:[%s5 + $0x30] sm:$0xff]
    %v627 = vld [vmem:[%s5 + $0x38] sm:$0xff]
    %v628 = vld [vmem:[%s5 + $0x40] sm:$0xff]
    %v629 = vld [vmem:[%s5 + $0x48] sm:$0xff]
    %v630 = vld [vmem:[%s5 + $0x50] sm:$0xff]
    %v631 = vld [vmem:[%s5 + $0x58] sm:$0xff]
    %v632 = vlaneseq
    %v633 = vshrl.u32 %v632, 7
    %v634 = vsub.s32 0, %v633
    %v635 = vrot.slane %v44, %v634
    %vm636 = vcmask 785408
    %v638 = vsel %vm636, %v618, 0
    %v641 = vsel %vm636, %v619, 0
    %643 = vmatprep.subr.mxu0 0.0
    %644 = vmatpush1.msra.mxu0 %v620
    %645 = vmatprep.subr.mxu0 0.0
    %646 = vmatpush1.msra.mxu0 %v621
    %647 = vmatprep.subr.mxu0 0.0
    %648 = vmatpush1.msra.mxu0 %v622
    %649 = vmatprep.subr.mxu0 0.0
    %650 = vmatpush1.msra.mxu0 %v623
    %651 = vmatprep.subr.mxu0 0.0
    %652 = vmatpush1.msra.mxu0 %v624
    %653 = vmatprep.subr.mxu0 0.0
    %654 = vmatpush1.msra.mxu0 %v625
    %655 = vmatprep.subr.mxu0 0.0
    %656 = vmatpush1.msra.mxu0 %v626
    %657 = vmatprep.subr.mxu0 0.0
    %658 = vmatpush1.msra.mxu0 %v627
    %659 = vmatprep.subr.mxu0 0.0
    %660 = vmatpush1.msra.mxu0 %v628
    %661 = vmatprep.subr.mxu0 0.0
    %662 = vmatpush1.msra.mxu0 %v629
    %663 = vmatprep.subr.mxu0 0.0
    %664 = vmatpush1.msra.mxu0 %v630
    %665 = vmatprep.subr.mxu0 0.0
    %666 = vmatpush1.msra.mxu0 %v631
    %667 = vmatprep.subr.mxu0 0.0
    %668 = vmatpush1.msra.mxu0 0.0
    %669 = vmatprep.subr.mxu0 0.0
    %670 = vmatpush1.msra.mxu0 0.0
    %671 = vmatprep.subr.mxu0 0.0
    %672 = vmatpush1.msra.mxu0 0.0
    %673 = vmatprep.subr.mxu0 0.0
    %674 = vmatpush1.msra.mxu0 0.0
    %675 = vmatprep.subr.mxu0 0.0
    %676 = vmatpush1.msra.mxu0 0.0
    %677 = vmatprep.subr.mxu0 0.0
    %678 = vmatpush1.msra.mxu0 0.0
    %679 = vmatprep.subr.mxu0 0.0
    %680 = vmatpush1.msra.mxu0 0.0
    %681 = vmatprep.subr.mxu0 0.0
    %682 = vmatpush1.msra.mxu0 0.0
    %683 = vmatprep.subr.mxu0 0.0
    %684 = vmatpush1.msra.mxu0 0.0
    %685 = vmatprep.subr.mxu0 0.0
    %686 = vmatpush1.msra.mxu0 0.0
    %687 = vmatprep.subr.mxu0 0.0
    %688 = vmatpush1.msra.mxu0 0.0
    %689 = vmatprep.subr.mxu0 0.0
    %690 = vmatpush1.msra.mxu0 0.0
    %691 = vmatprep.subr.mxu0 0.0
    %692 = vmatpush1.msra.mxu0 0.0
    %693 = vmatprep.subr.mxu0 0.0
    %694 = vmatpush1.msra.mxu0 0.0
    %695 = vmatprep.subr.mxu0 0.0
    %696 = vmatpush1.msra.mxu0 0.0
    %697 = vmatprep.subr.mxu0 0.0
    %698 = vmatpush1.msra.mxu0 0.0
    %699 = vmatprep.subr.mxu0 0.0
    %700 = vmatpush1.msra.mxu0 0.0
    %701 = vmatprep.subr.mxu0 0.0
    %702 = vmatpush1.msra.mxu0 0.0
    %703 = vmatprep.subr.mxu0 0.0
    %704 = vmatpush1.msra.mxu0 0.0
    %705 = vmatprep.subr.mxu0 0.0
    %706 = vmatpush1.msra.mxu0 0.0
    %707 = vmatprep.mubr.f32.mxu0 0.0
    %708 = vmatmul.mubr.f32.gmra.mrb[0].mxu0 %v638
    %v709 = vpop.f32.mrb[0].mxu0
    %v710 = vadd.f32 %v635, %v709
    %v711 = vpop.f32.mrb[0].mxu0
    %712 = vmatprep.mubr.f32.mxu0 0.0
    %713 = vmatmul.mubr.f32.gmra.mrb[0].mxu0 %v641
    %v714 = vpop.f32.mrb[0].mxu0
    %v715 = vadd.f32 %v635, %v714
    %v716 = vpop.f32.mrb[0].mxu0
    %717 = vdwg.mxu0
    %v718 = vmax.f32 %v710, 0.0
    %v719 = vmax.f32 %v715, 0.0
    %v720 = vmul.f32 %v610, %v610
    %v721 = vmul.f32 %v615, %v615
    %v722 = vld [vmem:[%s6] sm:$0xff]
    %v723 = vld [vmem:[%s6 + $0x8] sm:$0xff]
    %v724 = vld [vmem:[%s6 + $0x10] sm:$0xff]
    %v725 = vld [vmem:[%s6 + $0x18] sm:$0xff]
    %v726 = vld [vmem:[%s6 + $0x20] sm:$0xff]
    %v727 = vld [vmem:[%s6 + $0x28] sm:$0xff]
    %v728 = vld [vmem:[%s6 + $0x30] sm:$0xff]
    %v729 = vld [vmem:[%s6 + $0x38] sm:$0xff]
    %v730 = vld [vmem:[%s6 + $0x40] sm:$0xff]
    %v731 = vld [vmem:[%s6 + $0x48] sm:$0xff]
    %v732 = vld [vmem:[%s6 + $0x50] sm:$0xff]
    %v733 = vld [vmem:[%s6 + $0x58] sm:$0xff]
    %v734 = vlaneseq
    %v735 = vshrl.u32 %v734, 7
    %v736 = vsub.s32 0, %v735
    %v737 = vrot.slane %v45, %v736
    %v739 = vsel %vm636, %v720, 0
    %v742 = vsel %vm636, %v721, 0
    %744 = vmatprep.subr.mxu0 0.0
    %745 = vmatpush1.msra.mxu0 %v722
    %746 = vmatprep.subr.mxu0 0.0
    %747 = vmatpush1.msra.mxu0 %v723
    %748 = vmatprep.subr.mxu0 0.0
    %749 = vmatpush1.msra.mxu0 %v724
    %750 = vmatprep.subr.mxu0 0.0
    %751 = vmatpush1.msra.mxu0 %v725
    %752 = vmatprep.subr.mxu0 0.0
    %753 = vmatpush1.msra.mxu0 %v726
    %754 = vmatprep.subr.mxu0 0.0
    %755 = vmatpush1.msra.mxu0 %v727
    %756 = vmatprep.subr.mxu0 0.0
    %757 = vmatpush1.msra.mxu0 %v728
    %758 = vmatprep.subr.mxu0 0.0
    %759 = vmatpush1.msra.mxu0 %v729
    %760 = vmatprep.subr.mxu0 0.0
    %761 = vmatpush1.msra.mxu0 %v730
    %762 = vmatprep.subr.mxu0 0.0
    %763 = vmatpush1.msra.mxu0 %v731
    %764 = vmatprep.subr.mxu0 0.0
    %765 = vmatpush1.msra.mxu0 %v732
    %766 = vmatprep.subr.mxu0 0.0
    %767 = vmatpush1.msra.mxu0 %v733
    %768 = vmatprep.subr.mxu0 0.0
    %769 = vmatpush1.msra.mxu0 0.0
    %770 = vmatprep.subr.mxu0 0.0
    %771 = vmatpush1.msra.mxu0 0.0
    %772 = vmatprep.subr.mxu0 0.0
    %773 = vmatpush1.msra.mxu0 0.0
    %774 = vmatprep.subr.mxu0 0.0
    %775 = vmatpush1.msra.mxu0 0.0
    %776 = vmatprep.subr.mxu0 0.0
    %777 = vmatpush1.msra.mxu0 0.0
    %778 = vmatprep.subr.mxu0 0.0
    %779 = vmatpush1.msra.mxu0 0.0
    %780 = vmatprep.subr.mxu0 0.0
    %781 = vmatpush1.msra.mxu0 0.0
    %782 = vmatprep.subr.mxu0 0.0
    %783 = vmatpush1.msra.mxu0 0.0
    %784 = vmatprep.subr.mxu0 0.0
    %785 = vmatpush1.msra.mxu0 0.0
    %786 = vmatprep.subr.mxu0 0.0
    %787 = vmatpush1.msra.mxu0 0.0
    %788 = vmatprep.subr.mxu0 0.0
    %789 = vmatpush1.msra.mxu0 0.0
    %790 = vmatprep.subr.mxu0 0.0
    %791 = vmatpush1.msra.mxu0 0.0
    %792 = vmatprep.subr.mxu0 0.0
    %793 = vmatpush1.msra.mxu0 0.0
    %794 = vmatprep.subr.mxu0 0.0
    %795 = vmatpush1.msra.mxu0 0.0
    %796 = vmatprep.subr.mxu0 0.0
    %797 = vmatpush1.msra.mxu0 0.0
    %798 = vmatprep.subr.mxu0 0.0
    %799 = vmatpush1.msra.mxu0 0.0
    %800 = vmatprep.subr.mxu0 0.0
    %801 = vmatpush1.msra.mxu0 0.0
    %802 = vmatprep.subr.mxu0 0.0
    %803 = vmatpush1.msra.mxu0 0.0
    %804 = vmatprep.subr.mxu0 0.0
    %805 = vmatpush1.msra.mxu0 0.0
    %806 = vmatprep.subr.mxu0 0.0
    %807 = vmatpush1.msra.mxu0 0.0
    %808 = vmatprep.mubr.f32.mxu0 0.0
    %809 = vmatmul.mubr.f32.gmra.mrb[0].mxu0 %v739
    %v810 = vpop.f32.mrb[0].mxu0
    %v811 = vadd.f32 %v737, %v810
    %v812 = vpop.f32.mrb[0].mxu0
    %813 = vmatprep.mubr.f32.mxu0 0.0
    %814 = vmatmul.mubr.f32.gmra.mrb[0].mxu0 %v742
    %v815 = vpop.f32.mrb[0].mxu0
    %v816 = vadd.f32 %v737, %v815
    %v817 = vpop.f32.mrb[0].mxu0
    %818 = vdwg.mxu0
    %v819 = vmax.f32 %v811, 0.0
    %v820 = vmax.f32 %v816, 0.0
    %v821 = vpack.c.bf16 %v719, %v718
    %v822 = vld [vmem:[%s7] sm:$0xf]
    %v823 = vld [vmem:[%s7 + $0x4] sm:$0xf]
    %v824 = vld [vmem:[%s7 + $0x8] sm:$0xf]
    %v825 = vld [vmem:[%s7 + $0xc] sm:$0xf]
    %v826 = vld [vmem:[%s7 + $0x10] sm:$0xf]
    %v827 = vld [vmem:[%s7 + $0x14] sm:$0xf]
    %v828 = vld [vmem:[%s7 + $0x18] sm:$0xf]
    %v829 = vld [vmem:[%s7 + $0x1c] sm:$0xf]
    %v830 = vpack.c.bf16 %v820, %v819
    %v831 = vld [vmem:[%s7 + $0x20] sm:$0xf]
    %v832 = vld [vmem:[%s7 + $0x24] sm:$0xf]
    %v833 = vld [vmem:[%s7 + $0x28] sm:$0xf]
    %v834 = vld [vmem:[%s7 + $0x2c] sm:$0xf]
    %v835 = vld [vmem:[%s7 + $0x30] sm:$0xf]
    %v836 = vld [vmem:[%s7 + $0x34] sm:$0xf]
    %v837 = vld [vmem:[%s7 + $0x38] sm:$0xf]
    %v838 = vld [vmem:[%s7 + $0x3c] sm:$0xf]
    %v847 = vunpack.c.l.b16 %v831
    %v848 = vunpack.c.l.b16 %v832
    %v849 = vunpack.c.l.b16 %v833
    %v850 = vunpack.c.l.b16 %v834
    %v851 = vunpack.c.l.b16 %v835
    %v852 = vunpack.c.l.b16 %v836
    %v853 = vunpack.c.l.b16 %v837
    %v854 = vunpack.c.l.b16 %v838
    %v855 = vpack.c.b16 %v848, %v847
    %v856 = vpack.c.b16 %v850, %v849
    %v857 = vpack.c.b16 %v852, %v851
    %v858 = vpack.c.b16 %v854, %v853
    %vm863 = vcmask 523264
    %v865 = vsel %vm863, %v830, 0
    %867 = vmatprep.subr.bf16.mxu0 0
    %868 = vmatpush1.bf16.msra.mxu0 %v855
    %869 = vmatprep.subr.bf16.mxu0 0
    %870 = vmatpush1.bf16.msra.mxu0 %v856
    %871 = vmatprep.subr.bf16.mxu0 0
    %872 = vmatpush1.bf16.msra.mxu0 %v857
    %873 = vmatprep.subr.bf16.mxu0 0
    %874 = vmatpush1.bf16.msra.mxu0 %v858
    %875 = vmatprep.subr.bf16.mxu0 0
    %876 = vmatpush1.bf16.msra.mxu0 0
    %877 = vmatprep.subr.bf16.mxu0 0
    %878 = vmatpush1.bf16.msra.mxu0 0
    %879 = vmatprep.subr.bf16.mxu0 0
    %880 = vmatpush1.bf16.msra.mxu0 0
    %881 = vmatprep.subr.bf16.mxu0 0
    %882 = vmatpush1.bf16.msra.mxu0 0
    %883 = vmatprep.subr.bf16.mxu0 0
    %884 = vmatpush1.bf16.msra.mxu0 0
    %885 = vmatprep.subr.bf16.mxu0 0
    %886 = vmatpush1.bf16.msra.mxu0 0
    %887 = vmatprep.subr.bf16.mxu0 0
    %888 = vmatpush1.bf16.msra.mxu0 0
    %889 = vmatprep.subr.bf16.mxu0 0
    %890 = vmatpush1.bf16.msra.mxu0 0
    %891 = vmatprep.subr.bf16.mxu0 0
    %892 = vmatpush1.bf16.msra.mxu0 0
    %893 = vmatprep.subr.bf16.mxu0 0
    %894 = vmatpush1.bf16.msra.mxu0 0
    %895 = vmatprep.subr.bf16.mxu0 0
    %896 = vmatpush1.bf16.msra.mxu0 0
    %897 = vmatprep.subr.bf16.mxu0 0
    %898 = vmatpush1.bf16.msra.mxu0 0
    %899 = vmatprep.mubr.bf16.mxu0 0
    %900 = vmatmul.mubr.bf16.gmra.mrb[0].mxu0 %v865
    %v901 = vpop.f32.mrb[0].mxu0
    %v902 = vadd.f32 0.0, %v901
    %v903 = vpop.f32.mrb[0].mxu0
    %v904 = vpop.f32.mrb[0].mxu0
    %v905 = vadd.f32 0.0, %v904
    %v906 = vpop.f32.mrb[0].mxu0
    %907 = vdwg.mxu0
    %v916 = vunpack.c.l.b16 %v822
    %v917 = vunpack.c.l.b16 %v823
    %v918 = vunpack.c.l.b16 %v824
    %v919 = vunpack.c.l.b16 %v825
    %v920 = vunpack.c.l.b16 %v826
    %v921 = vunpack.c.l.b16 %v827
    %v922 = vunpack.c.l.b16 %v828
    %v923 = vunpack.c.l.b16 %v829
    %v924 = vpack.c.b16 %v917, %v916
    %v925 = vpack.c.b16 %v919, %v918
    %v926 = vpack.c.b16 %v921, %v920
    %v927 = vpack.c.b16 %v923, %v922
    %v933 = vsel %vm863, %v821, 0
    %935 = vmatprep.subr.bf16.mxu0 0
    %936 = vmatpush1.bf16.msra.mxu0 %v924
    %937 = vmatprep.subr.bf16.mxu0 0
    %938 = vmatpush1.bf16.msra.mxu0 %v925
    %939 = vmatprep.subr.bf16.mxu0 0
    %940 = vmatpush1.bf16.msra.mxu0 %v926
    %941 = vmatprep.subr.bf16.mxu0 0
    %942 = vmatpush1.bf16.msra.mxu0 %v927
    %943 = vmatprep.subr.bf16.mxu0 0
    %944 = vmatpush1.bf16.msra.mxu0 0
    %945 = vmatprep.subr.bf16.mxu0 0
    %946 = vmatpush1.bf16.msra.mxu0 0
    %947 = vmatprep.subr.bf16.mxu0 0
    %948 = vmatpush1.bf16.msra.mxu0 0
    %949 = vmatprep.subr.bf16.mxu0 0
    %950 = vmatpush1.bf16.msra.mxu0 0
    %951 = vmatprep.subr.bf16.mxu0 0
    %952 = vmatpush1.bf16.msra.mxu0 0
    %953 = vmatprep.subr.bf16.mxu0 0
    %954 = vmatpush1.bf16.msra.mxu0 0
    %955 = vmatprep.subr.bf16.mxu0 0
    %956 = vmatpush1.bf16.msra.mxu0 0
    %957 = vmatprep.subr.bf16.mxu0 0
    %958 = vmatpush1.bf16.msra.mxu0 0
    %959 = vmatprep.subr.bf16.mxu0 0
    %960 = vmatpush1.bf16.msra.mxu0 0
    %961 = vmatprep.subr.bf16.mxu0 0
    %962 = vmatpush1.bf16.msra.mxu0 0
    %963 = vmatprep.subr.bf16.mxu0 0
    %964 = vmatpush1.bf16.msra.mxu0 0
    %965 = vmatprep.subr.bf16.mxu0 0
    %966 = vmatpush1.bf16.msra.mxu0 0
    %967 = vmatprep.mubr.bf16.mxu0 0
    %968 = vmatmul.mubr.bf16.gmra.mrb[0].mxu0 %v933
    %v969 = vpop.f32.mrb[0].mxu0
    %v970 = vadd.f32 %v902, %v969
    %v971 = vpop.f32.mrb[0].mxu0
    %v972 = vpop.f32.mrb[0].mxu0
    %v973 = vadd.f32 %v905, %v972
    %v974 = vpop.f32.mrb[0].mxu0
    %975 = vdwg.mxu0
    %v976 = vlaneseq
    %v977 = vshrl.u32 %v976, 7
    %v978 = vsub.s32 0, %v977
    %v979 = vrot.slane %v41, %v978
    %v980 = vadd.f32 %v970, %v979
    %v981 = vadd.f32 %v973, %v979
    %v982 = vmax.f32 %v980, 0.0
    %v983 = vmax.f32 %v981, 0.0
    %v984 = vpack.c.bf16 %v983, %v982
    %v985 = vld [vmem:[%s8] sm:$0xf]
    %v986 = vld [vmem:[%s8 + $0x4] sm:$0xf]
    %v987 = vld [vmem:[%s8 + $0x8] sm:$0xf]
    %v988 = vld [vmem:[%s8 + $0xc] sm:$0xf]
    %v989 = vld [vmem:[%s8 + $0x10] sm:$0xf]
    %v990 = vld [vmem:[%s8 + $0x14] sm:$0xf]
    %v991 = vld [vmem:[%s8 + $0x18] sm:$0xf]
    %v992 = vld [vmem:[%s8 + $0x1c] sm:$0xf]
    %v993 = vld [vmem:[%s8 + $0x20] sm:$0xf]
    %v994 = vld [vmem:[%s8 + $0x24] sm:$0xf]
    %v995 = vld [vmem:[%s8 + $0x28] sm:$0xf]
    %v996 = vld [vmem:[%s8 + $0x2c] sm:$0xf]
    %v997 = vld [vmem:[%s8 + $0x30] sm:$0xf]
    %v998 = vld [vmem:[%s8 + $0x34] sm:$0xf]
    %v999 = vld [vmem:[%s8 + $0x38] sm:$0xf]
    %v1000 = vld [vmem:[%s8 + $0x3c] sm:$0xf]
    %v1001 = vlaneseq
    %v1002 = vshrl.u32 %v1001, 7
    %v1003 = vsub.s32 0, %v1002
    %v1004 = vrot.slane %v46, %v1003
    %v1021 = vunpack.c.l.b16 %v985
    %v1022 = vunpack.c.l.b16 %v986
    %v1023 = vunpack.c.l.b16 %v987
    %v1024 = vunpack.c.l.b16 %v988
    %v1025 = vunpack.c.l.b16 %v989
    %v1026 = vunpack.c.l.b16 %v990
    %v1027 = vunpack.c.l.b16 %v991
    %v1028 = vunpack.c.l.b16 %v992
    %v1029 = vunpack.c.l.b16 %v993
    %v1030 = vunpack.c.l.b16 %v994
    %v1031 = vunpack.c.l.b16 %v995
    %v1032 = vunpack.c.l.b16 %v996
    %v1033 = vunpack.c.l.b16 %v997
    %v1034 = vunpack.c.l.b16 %v998
    %v1035 = vunpack.c.l.b16 %v999
    %v1036 = vunpack.c.l.b16 %v1000
    %v1037 = vpack.c.b16 %v1022, %v1021
    %v1038 = vpack.c.b16 %v1024, %v1023
    %v1039 = vpack.c.b16 %v1026, %v1025
    %v1040 = vpack.c.b16 %v1028, %v1027
    %v1041 = vpack.c.b16 %v1030, %v1029
    %v1042 = vpack.c.b16 %v1032, %v1031
    %v1043 = vpack.c.b16 %v1034, %v1033
    %v1044 = vpack.c.b16 %v1036, %v1035
    %1053 = vmatprep.subr.bf16.mxu0 0
    %1054 = vmatpush1.bf16.msra.mxu0 %v1037
    %1055 = vmatprep.subr.bf16.mxu0 0
    %1056 = vmatpush1.bf16.msra.mxu0 %v1038
    %1057 = vmatprep.subr.bf16.mxu0 0
    %1058 = vmatpush1.bf16.msra.mxu0 %v1039
    %1059 = vmatprep.subr.bf16.mxu0 0
    %1060 = vmatpush1.bf16.msra.mxu0 %v1040
    %1061 = vmatprep.subr.bf16.mxu0 0
    %1062 = vmatpush1.bf16.msra.mxu0 %v1041
    %1063 = vmatprep.subr.bf16.mxu0 0
    %1064 = vmatpush1.bf16.msra.mxu0 %v1042
    %1065 = vmatprep.subr.bf16.mxu0 0
    %1066 = vmatpush1.bf16.msra.mxu0 %v1043
    %1067 = vmatprep.subr.bf16.mxu0 0
    %1068 = vmatpush1.bf16.msra.mxu0 %v1044
    %1069 = vmatprep.subr.bf16.mxu0 0
    %1070 = vmatpush1.bf16.msra.mxu0 0
    %1071 = vmatprep.subr.bf16.mxu0 0
    %1072 = vmatpush1.bf16.msra.mxu0 0
    %1073 = vmatprep.subr.bf16.mxu0 0
    %1074 = vmatpush1.bf16.msra.mxu0 0
    %1075 = vmatprep.subr.bf16.mxu0 0
    %1076 = vmatpush1.bf16.msra.mxu0 0
    %1077 = vmatprep.subr.bf16.mxu0 0
    %1078 = vmatpush1.bf16.msra.mxu0 0
    %1079 = vmatprep.subr.bf16.mxu0 0
    %1080 = vmatpush1.bf16.msra.mxu0 0
    %1081 = vmatprep.subr.bf16.mxu0 0
    %1082 = vmatpush1.bf16.msra.mxu0 0
    %1083 = vmatprep.subr.bf16.mxu0 0
    %1084 = vmatpush1.bf16.msra.mxu0 0
    %1085 = vmatprep.mubr.bf16.mxu0 0
    %1086 = vmatmul.mubr.bf16.gmra.mrb[0].mxu0 %v984
    %v1087 = vpop.f32.mrb[0].mxu0
    %v1088 = vadd.f32 %v1004, %v1087
    %v1089 = vpop.f32.mrb[0].mxu0
    %v1090 = vpop.f32.mrb[0].mxu0
    %v1091 = vadd.f32 %v1004, %v1090
    %v1092 = vpop.f32.mrb[0].mxu0
    %1093 = vdwg.mxu0
    %v1094 = vmax.f32 %v1088, 0.0
    %v1095 = vmax.f32 %v1091, 0.0
    %v1096 = vld [vmem:[%s9] sm:$0xff]
    %v1098 = vsel %vm863, %v1096, 0
    %v1101 = vsel %vm863, %v1094, 0
    %v1104 = vsel %vm863, %v1095, 0
    %1106 = vmatprep.subr.mxu0 0.0
    %1107 = vmatpush1.xpose.msra.mxu0 %v1101
    %1108 = vmatprep.subr.mxu0 0.0
    %1109 = vmatpush1.xpose.msra.mxu0 %v1104
    %1110 = vmatprep.subr.mxu0 0.0
    %1111 = vmatpush1.xpose.msra.mxu0 0.0
    %1112 = vmatprep.subr.mxu0 0.0
    %1113 = vmatpush1.xpose.msra.mxu0 0.0
    %1114 = vmatprep.subr.mxu0 0.0
    %1115 = vmatpush1.xpose.msra.mxu0 0.0
    %1116 = vmatprep.subr.mxu0 0.0
    %1117 = vmatpush1.xpose.msra.mxu0 0.0
    %1118 = vmatprep.subr.mxu0 0.0
    %1119 = vmatpush1.xpose.msra.mxu0 0.0
    %1120 = vmatprep.subr.mxu0 0.0
    %1121 = vmatpush1.xpose.msra.mxu0 0.0
    %1122 = vmatprep.subr.mxu0 0.0
    %1123 = vmatpush1.xpose.msra.mxu0 0.0
    %1124 = vmatprep.subr.mxu0 0.0
    %1125 = vmatpush1.xpose.msra.mxu0 0.0
    %1126 = vmatprep.subr.mxu0 0.0
    %1127 = vmatpush1.xpose.msra.mxu0 0.0
    %1128 = vmatprep.subr.mxu0 0.0
    %1129 = vmatpush1.xpose.msra.mxu0 0.0
    %1130 = vmatprep.subr.mxu0 0.0
    %1131 = vmatpush1.xpose.msra.mxu0 0.0
    %1132 = vmatprep.subr.mxu0 0.0
    %1133 = vmatpush1.xpose.msra.mxu0 0.0
    %1134 = vmatprep.subr.mxu0 0.0
    %1135 = vmatpush1.xpose.msra.mxu0 0.0
    %1136 = vmatprep.subr.mxu0 0.0
    %1137 = vmatpush1.xpose.msra.mxu0 0.0
    %1138 = vmatprep.subr.mxu0 0.0
    %1139 = vmatpush1.xpose.msra.mxu0 0.0
    %1140 = vmatprep.subr.mxu0 0.0
    %1141 = vmatpush1.xpose.msra.mxu0 0.0
    %1142 = vmatprep.subr.mxu0 0.0
    %1143 = vmatpush1.xpose.msra.mxu0 0.0
    %1144 = vmatprep.subr.mxu0 0.0
    %1145 = vmatpush1.xpose.msra.mxu0 0.0
    %1146 = vmatprep.subr.mxu0 0.0
    %1147 = vmatpush1.xpose.msra.mxu0 0.0
    %1148 = vmatprep.subr.mxu0 0.0
    %1149 = vmatpush1.xpose.msra.mxu0 0.0
    %1150 = vmatprep.subr.mxu0 0.0
    %1151 = vmatpush1.xpose.msra.mxu0 0.0
    %1152 = vmatprep.subr.mxu0 0.0
    %1153 = vmatpush1.xpose.msra.mxu0 0.0
    %1154 = vmatprep.subr.mxu0 0.0
    %1155 = vmatpush1.xpose.msra.mxu0 0.0
    %1156 = vmatprep.subr.mxu0 0.0
    %1157 = vmatpush1.xpose.msra.mxu0 0.0
    %1158 = vmatprep.subr.mxu0 0.0
    %1159 = vmatpush1.xpose.msra.mxu0 0.0
    %1160 = vmatprep.subr.mxu0 0.0
    %1161 = vmatpush1.xpose.msra.mxu0 0.0
    %1162 = vmatprep.subr.mxu0 0.0
    %1163 = vmatpush1.xpose.msra.mxu0 0.0
    %1164 = vmatprep.subr.mxu0 0.0
    %1165 = vmatpush1.xpose.msra.mxu0 0.0
    %1166 = vmatprep.subr.mxu0 0.0
    %1167 = vmatpush1.xpose.msra.mxu0 0.0
    %1168 = vmatprep.subr.mxu0 0.0
    %1169 = vmatpush1.xpose.msra.mxu0 0.0
    %1170 = vmatprep.mubr.f32.mxu0 0.0
    %1171 = vmatmul.mubr.f32.gmra.mrb[0].mxu0 %v1098
    %v1172 = vpop.f32.mrb[0].mxu0
    %v1173 = vadd.f32 0.0, %v1172
    %v1174 = vpop.f32.mrb[0].mxu0
    %1175 = vdwg.mxu0
    %1177 = vset.pattern.permute.xlu0 0
    %1178 = vperm.xlu0 %1177, %v47
    %v1179 = vpop.permute.xlu0 %1178
    %v1181 = vadd.f32 %v1173, %v1179
    %v1182 = vtanh.pop %v1181
    %v1183 = vadd.f32 %v1182, 1.0
    %v1184 = vmul.f32 %v1183, 0.5
    %v1185 = vmul.f32 %v1184, 15.0
    %v1186 = vadd.f32 %v1185, 1.0
    %vm1187 = vcmask 122880
    %1188 = vst.msk [vmem:[#allocation2] sm:$0x1] %vm1187, %v1186
    // Predicated region
    $region46: #{tpu_custom_call.1} parent=1 // pred_check
      _
    $region47: #{tpu_custom_call.1} parent=1 // pred_check_branch
      %1190 = sbr.rel (0) target = $region49
    $region48: #{tpu_custom_call.1} parent=1 // pred_region
      %s1192 = ssub.s32 16, 16
      %1193 = vsyncadd [#allocation3], %s1192
      %s1195 = sshll.u32 [#allocation2], 4
      %s1196 = int_to_ptr.vmem [resolvable:$true] %s1195
      %1198 = dma.vmem_to_hbm [thread:$0]  %s1196, 16, %s11, [#allocation3]
    $region49: #{tpu_custom_call.1} parent=1 // pred_fallthru
      _
    // Predicated region
    $region50: #{tpu_custom_call.1} parent=1 // pred_check
      _
    $region51: #{tpu_custom_call.1} parent=1 // pred_check_branch
      %1200 = sbr.rel (0) target = $region53
    $region52: #{tpu_custom_call.1} parent=1 // pred_region
      %1201 = dma.done [#allocation3], 16
    $region53: #{tpu_custom_call.1} parent=1 // pred_fallthru
      _
    %1202 = vsyncpa [#allocation3], 1

</llo_original>
